<compile_context>
chip_gen: v7x
topology: tpu7x:2x2x1
jax: 0.10.0
libtpu: 0.0.40
codegen_flags: <defaults>
</compile_context>

<pallas_src>
import jax
import jax.numpy as jnp
from jax.experimental import pallas as pl
from jax.experimental.pallas import tpu as pltpu


OUT_PAD = 128  # classifier output padded to a full 128-lane vector register


def _round_up(x, m):
    return ((x + m - 1) // m) * m


def mlp_kernel(x_ref,
               w1, b1, w2, b2, w3, b3, w4, b4, w5, b5, w6, b6,
               out_ref):
    """Fused 6-layer MLP. Weights arrive as bf16; accumulate / bias / ReLU in f32."""
    relu = lambda v: jnp.maximum(v, 0.0)

    def dense(a, w_ref, b_ref):
        # bf16 operands -> native MXU rate; f32 accumulation via preferred_element_type.
        return jnp.dot(a.astype(jnp.bfloat16), w_ref[...],
                       preferred_element_type=jnp.float32) + b_ref[...]

    x = x_ref[...]                      # [tb, 48]  = [image | other]
    h = relu(dense(x, w1, b1))          # [tb, 192] = [img branch L1 | other branch L1]
    h = relu(dense(h, w2, b2))          # [tb, 192] = [img passthrough | other branch L2]
    h = relu(dense(h, w3, b3))          # [tb, 512]   (fused concat + Linear(192,512))
    h = relu(dense(h, w4, b4))          # [tb, 256]
    h = relu(dense(h, w5, b5))          # [tb, 128]
    out_ref[...] = dense(h, w6, b6)     # [tb, 128]   (lane-padded classifier, no ReLU)


def fuse_params(p):
    """Build the fused / padded bf16 weights consumed by the kernel from f32 params."""
    bf = jnp.bfloat16
    img_in, h_img = p["w_img"].shape      # (image_length, 64)
    oth_in, h_o1 = p["w_o1"].shape        # (other_length, 128)
    out_len = p["w6"].shape[1]

    # layer 1: block-diag [[w_img, 0], [0, w_o1]] : (img_in+oth_in, 192)
    w1 = jnp.zeros((img_in + oth_in, h_img + h_o1), jnp.float32)
    w1 = w1.at[:img_in, :h_img].set(p["w_img"])
    w1 = w1.at[img_in:, h_img:].set(p["w_o1"])
    b1 = jnp.concatenate([p["b_img"], p["b_o1"]], axis=1)

    # layer 2: [[I_64, 0], [0, w_o2]] : image features pass through, other branch layer 2
    w2 = jnp.zeros((h_img + h_o1, h_img + h_o1), jnp.float32)
    w2 = w2.at[:h_img, :h_img].set(jnp.eye(h_img, dtype=jnp.float32))
    w2 = w2.at[h_img:, h_img:].set(p["w_o2"])
    b2 = jnp.concatenate([jnp.zeros((1, h_img), jnp.float32), p["b_o2"]], axis=1)

    # classifier padded to 128 output lanes (zero columns sliced off in the wrapper)
    w6 = jnp.zeros((p["w6"].shape[0], OUT_PAD), jnp.float32).at[:, :out_len].set(p["w6"])
    b6 = jnp.zeros((1, OUT_PAD), jnp.float32).at[:, :out_len].set(p["b6"])

    return dict(
        w1=w1.astype(bf), b1=b1,
        w2=w2.astype(bf), b2=b2,
        w3=p["w3"].astype(bf), b3=p["b3"],
        w4=p["w4"].astype(bf), b4=p["b4"],
        w5=p["w5"].astype(bf), b5=p["b5"],
        w6=w6.astype(bf), b6=b6,
    )


def multimodal_forward(image, other, params, *, tb=128):
    """image: [B, image_length], other: [B, other_length] -> [B, output_length]."""
    B = image.shape[0]
    out_len = params["b6"].shape[-1]
    fused = fuse_params(params)

    # Concat once in the wrapper; inside the kernel it is a single 48-wide input.
    x = jnp.concatenate([image, other], axis=1).astype(jnp.float32)
    in_dim = x.shape[1]

    # Effective batch tile: multiple of 8, no larger than the (padded) batch.
    tb_eff = max(8, min(tb, _round_up(B, 8)))
    B_pad = _round_up(B, tb_eff)
    if B_pad != B:
        x = jnp.pad(x, ((0, B_pad - B), (0, 0)))

    weight_order = ["w1", "b1", "w2", "b2", "w3", "b3",
                    "w4", "b4", "w5", "b5", "w6", "b6"]
    weight_args = [fused[k] for k in weight_order]

    # Full-array specs with a constant index_map -> weights stay resident in VMEM.
    # TODO(synk): could request pl.Buffered(1) for weights to drop double-buffering
    # (minor VMEM/DMA-descriptor saving); kept default for maximum compile robustness.
    def full_spec(arr):
        return pl.BlockSpec(arr.shape, lambda i: (0, 0))

    grid = (B_pad // tb_eff,)
    in_specs = ([pl.BlockSpec((tb_eff, in_dim), lambda i: (i, 0))]
                + [full_spec(w) for w in weight_args])
    out_spec = pl.BlockSpec((tb_eff, OUT_PAD), lambda i: (i, 0))

    out = pl.pallas_call(
        mlp_kernel,
        out_shape=jax.ShapeDtypeStruct((B_pad, OUT_PAD), jnp.float32),
        grid_spec=pltpu.PrefetchScalarGridSpec(
            num_scalar_prefetch=0,
            grid=grid,
            in_specs=in_specs,
            out_specs=out_spec,
        ),
        compiler_params=pltpu.CompilerParams(
            dimension_semantics=("parallel",)),
    )(x, *weight_args)

    return out[:B, :out_len]


def init_params(key, image_length, other_length, output_length):
    """Deterministic synthetic params. Weights stored as (in, out); biases as (1, out)."""
    def lin(k, fan_in, fan_out):
        kw, kb = jax.random.split(k)
        scale = 1.0 / jnp.sqrt(jnp.float32(fan_in))
        w = jax.random.uniform(kw, (fan_in, fan_out), jnp.float32, -scale, scale)
        b = jax.random.uniform(kb, (1, fan_out), jnp.float32, -scale, scale)
        return w, b

    keys = jax.random.split(key, 7)
    w_img, b_img = lin(keys[0], image_length, 64)
    w_o1, b_o1 = lin(keys[1], other_length, 128)
    w_o2, b_o2 = lin(keys[2], 128, 128)
    w3, b3 = lin(keys[3], 192, 512)      # concat(64 + 128) -> 512
    w4, b4 = lin(keys[4], 512, 256)
    w5, b5 = lin(keys[5], 256, 128)
    w6, b6 = lin(keys[6], 128, output_length)

    return {
        "w_img": w_img, "b_img": b_img,
        "w_o1": w_o1, "b_o1": b_o1,
        "w_o2": w_o2, "b_o2": b_o2,
        "w3": w3, "b3": b3,
        "w4": w4, "b4": b4,
        "w5": w5, "b5": b5,
        "w6": w6, "b6": b6,
    }


def reference_forward(image, other, p):
    """Mirrors the PyTorch module structure; bf16 matmul operands, f32 accumulation."""
    relu = lambda v: jnp.maximum(v, 0.0)
    bf = jnp.bfloat16

    def lin(x, w, b):
        return jnp.dot(x.astype(bf), w.astype(bf),
                       preferred_element_type=jnp.float32) + b

    hi = relu(lin(image, p["w_img"], p["b_img"]))
    ho = relu(lin(other, p["w_o1"], p["b_o1"]))
    ho = relu(lin(ho, p["w_o2"], p["b_o2"]))
    cat = jnp.concatenate([hi, ho], axis=1)
    h = relu(lin(cat, p["w3"], p["b3"]))
    h = relu(lin(h, p["w4"], p["b4"]))
    h = relu(lin(h, p["w5"], p["b5"]))
    return lin(h, p["w6"], p["b6"])


if __name__ == "__main__":
    image_length, other_length, output_length = 32, 16, 10
    batch = 256  # tb=128 -> grid of 2 "parallel" steps (keeps both v7x TensorCores busy)

    key = jax.random.PRNGKey(0)
    k_img, k_oth, k_par = jax.random.split(key, 3)

    image = jax.random.normal(k_img, (batch, image_length), jnp.float32)
    other = jax.random.normal(k_oth, (batch, other_length), jnp.float32)
    params = init_params(k_par, image_length, other_length, output_length)

    out = multimodal_forward(image, other, params, tb=128)
    out = jax.block_until_ready(out)

    ref = reference_forward(image, other, params)
    assert out.shape == (batch, output_length)
    max_err = float(jnp.max(jnp.abs(out - ref)))
    assert jnp.allclose(out, ref, atol=2e-2, rtol=2e-2), \
        f"mismatch vs JAX reference (max abs err {max_err})"

    print("KERNEL_OK")
</pallas_src>

<mosaic_0001>
module attributes {stable_mosaic.version = 11 : i64} {
  func.func @mlp_kernel(%arg0: i32, %arg1: memref<128x48xf32, #tpu.memory_space<vmem>>, %arg2: memref<48x192xbf16, #tpu.memory_space<vmem>>, %arg3: memref<1x192xf32, #tpu.memory_space<vmem>>, %arg4: memref<192x192xbf16, #tpu.memory_space<vmem>>, %arg5: memref<1x192xf32, #tpu.memory_space<vmem>>, %arg6: memref<192x512xbf16, #tpu.memory_space<vmem>>, %arg7: memref<1x512xf32, #tpu.memory_space<vmem>>, %arg8: memref<512x256xbf16, #tpu.memory_space<vmem>>, %arg9: memref<1x256xf32, #tpu.memory_space<vmem>>, %arg10: memref<256x128xbf16, #tpu.memory_space<vmem>>, %arg11: memref<1x128xf32, #tpu.memory_space<vmem>>, %arg12: memref<128x128xbf16, #tpu.memory_space<vmem>>, %arg13: memref<1x128xf32, #tpu.memory_space<vmem>>, %arg14: memref<128x128xf32, #tpu.memory_space<vmem>>) attributes {dimension_semantics = [#tpu.dimension_semantics<parallel>], iteration_bounds = array<i64: 2>, scalar_prefetch = 0 : i64, scratch_operands = 0 : i64, tpu.core_type = #tpu.core_type<tc>, window_params = [{transform_indices = @transform_0, window_bounds = array<i64: 128, 48>}, {pipeline_mode = #tpu.pipeline_mode<synchronous>, transform_indices = @transform_1, window_bounds = array<i64: 48, 192>}, {pipeline_mode = #tpu.pipeline_mode<synchronous>, transform_indices = @transform_2, window_bounds = array<i64: 1, 192>}, {pipeline_mode = #tpu.pipeline_mode<synchronous>, transform_indices = @transform_3, window_bounds = array<i64: 192, 192>}, {pipeline_mode = #tpu.pipeline_mode<synchronous>, transform_indices = @transform_4, window_bounds = array<i64: 1, 192>}, {pipeline_mode = #tpu.pipeline_mode<synchronous>, transform_indices = @transform_5, window_bounds = array<i64: 192, 512>}, {pipeline_mode = #tpu.pipeline_mode<synchronous>, transform_indices = @transform_6, window_bounds = array<i64: 1, 512>}, {pipeline_mode = #tpu.pipeline_mode<synchronous>, transform_indices = @transform_7, window_bounds = array<i64: 512, 256>}, {pipeline_mode = #tpu.pipeline_mode<synchronous>, transform_indices = @transform_8, window_bounds = array<i64: 1, 256>}, {pipeline_mode = #tpu.pipeline_mode<synchronous>, transform_indices = @transform_9, window_bounds = array<i64: 256, 128>}, {pipeline_mode = #tpu.pipeline_mode<synchronous>, transform_indices = @transform_10, window_bounds = array<i64: 1, 128>}, {pipeline_mode = #tpu.pipeline_mode<synchronous>, transform_indices = @transform_11, window_bounds = array<i64: 128, 128>}, {pipeline_mode = #tpu.pipeline_mode<synchronous>, transform_indices = @transform_12, window_bounds = array<i64: 1, 128>}, {transform_indices = @transform_13, window_bounds = array<i64: 128, 128>}]} {
    %c0 = arith.constant 0 : index
    %c0_0 = arith.constant 0 : index
    %0 = vector.load %arg1[%c0, %c0_0] : memref<128x48xf32, #tpu.memory_space<vmem>>, vector<128x48xf32>
    %1 = arith.truncf %0 : vector<128x48xf32> to vector<128x48xbf16>
    %c0_1 = arith.constant 0 : index
    %c0_2 = arith.constant 0 : index
    %2 = vector.load %arg2[%c0_1, %c0_2] : memref<48x192xbf16, #tpu.memory_space<vmem>>, vector<48x192xbf16>
    %cst = arith.constant dense<0.000000e+00> : vector<128x192xf32>
    %3 = tpu.matmul %1, %2, %cst {dimension_numbers = #tpu.dot_dimension_numbers<[1], [0], [0], [1], [0, 0, 1, 1], [], []>} : vector<128x48xbf16>, vector<48x192xbf16>, vector<128x192xf32> -> vector<128x192xf32>
    %c0_3 = arith.constant 0 : index
    %c0_4 = arith.constant 0 : index
    %4 = vector.load %arg3[%c0_3, %c0_4] : memref<1x192xf32, #tpu.memory_space<vmem>>, vector<1x192xf32>
    %5 = vector.broadcast %4 : vector<1x192xf32> to vector<128x192xf32>
    %6 = arith.addf %3, %5 : vector<128x192xf32>
    %cst_5 = arith.constant 0.000000e+00 : f32
    %7 = vector.broadcast %cst_5 : f32 to vector<128x192xf32>
    %8 = arith.maximumf %6, %7 : vector<128x192xf32>
    %9 = arith.truncf %8 : vector<128x192xf32> to vector<128x192xbf16>
    %c0_6 = arith.constant 0 : index
    %c0_7 = arith.constant 0 : index
    %10 = vector.load %arg4[%c0_6, %c0_7] : memref<192x192xbf16, #tpu.memory_space<vmem>>, vector<192x192xbf16>
    %cst_8 = arith.constant dense<0.000000e+00> : vector<128x192xf32>
    %11 = tpu.matmul %9, %10, %cst_8 {dimension_numbers = #tpu.dot_dimension_numbers<[1], [0], [0], [1], [0, 0, 1, 1], [], []>} : vector<128x192xbf16>, vector<192x192xbf16>, vector<128x192xf32> -> vector<128x192xf32>
    %c0_9 = arith.constant 0 : index
    %c0_10 = arith.constant 0 : index
    %12 = vector.load %arg5[%c0_9, %c0_10] : memref<1x192xf32, #tpu.memory_space<vmem>>, vector<1x192xf32>
    %13 = vector.broadcast %12 : vector<1x192xf32> to vector<128x192xf32>
    %14 = arith.addf %11, %13 : vector<128x192xf32>
    %cst_11 = arith.constant 0.000000e+00 : f32
    %15 = vector.broadcast %cst_11 : f32 to vector<128x192xf32>
    %16 = arith.maximumf %14, %15 : vector<128x192xf32>
    %17 = arith.truncf %16 : vector<128x192xf32> to vector<128x192xbf16>
    %c0_12 = arith.constant 0 : index
    %c0_13 = arith.constant 0 : index
    %18 = vector.load %arg6[%c0_12, %c0_13] : memref<192x512xbf16, #tpu.memory_space<vmem>>, vector<192x512xbf16>
    %cst_14 = arith.constant dense<0.000000e+00> : vector<128x512xf32>
    %19 = tpu.matmul %17, %18, %cst_14 {dimension_numbers = #tpu.dot_dimension_numbers<[1], [0], [0], [1], [0, 0, 1, 1], [], []>} : vector<128x192xbf16>, vector<192x512xbf16>, vector<128x512xf32> -> vector<128x512xf32>
    %c0_15 = arith.constant 0 : index
    %c0_16 = arith.constant 0 : index
    %20 = vector.load %arg7[%c0_15, %c0_16] : memref<1x512xf32, #tpu.memory_space<vmem>>, vector<1x512xf32>
    %21 = vector.broadcast %20 : vector<1x512xf32> to vector<128x512xf32>
    %22 = arith.addf %19, %21 : vector<128x512xf32>
    %cst_17 = arith.constant 0.000000e+00 : f32
    %23 = vector.broadcast %cst_17 : f32 to vector<128x512xf32>
    %24 = arith.maximumf %22, %23 : vector<128x512xf32>
    %25 = arith.truncf %24 : vector<128x512xf32> to vector<128x512xbf16>
    %c0_18 = arith.constant 0 : index
    %c0_19 = arith.constant 0 : index
    %26 = vector.load %arg8[%c0_18, %c0_19] : memref<512x256xbf16, #tpu.memory_space<vmem>>, vector<512x256xbf16>
    %cst_20 = arith.constant dense<0.000000e+00> : vector<128x256xf32>
    %27 = tpu.matmul %25, %26, %cst_20 {dimension_numbers = #tpu.dot_dimension_numbers<[1], [0], [0], [1], [0, 0, 1, 1], [], []>} : vector<128x512xbf16>, vector<512x256xbf16>, vector<128x256xf32> -> vector<128x256xf32>
    %c0_21 = arith.constant 0 : index
    %c0_22 = arith.constant 0 : index
    %28 = vector.load %arg9[%c0_21, %c0_22] : memref<1x256xf32, #tpu.memory_space<vmem>>, vector<1x256xf32>
    %29 = vector.broadcast %28 : vector<1x256xf32> to vector<128x256xf32>
    %30 = arith.addf %27, %29 : vector<128x256xf32>
    %cst_23 = arith.constant 0.000000e+00 : f32
    %31 = vector.broadcast %cst_23 : f32 to vector<128x256xf32>
    %32 = arith.maximumf %30, %31 : vector<128x256xf32>
    %33 = arith.truncf %32 : vector<128x256xf32> to vector<128x256xbf16>
    %c0_24 = arith.constant 0 : index
    %c0_25 = arith.constant 0 : index
    %34 = vector.load %arg10[%c0_24, %c0_25] : memref<256x128xbf16, #tpu.memory_space<vmem>>, vector<256x128xbf16>
    %cst_26 = arith.constant dense<0.000000e+00> : vector<128x128xf32>
    %35 = tpu.matmul %33, %34, %cst_26 {dimension_numbers = #tpu.dot_dimension_numbers<[1], [0], [0], [1], [0, 0, 1, 1], [], []>} : vector<128x256xbf16>, vector<256x128xbf16>, vector<128x128xf32> -> vector<128x128xf32>
    %c0_27 = arith.constant 0 : index
    %c0_28 = arith.constant 0 : index
    %36 = vector.load %arg11[%c0_27, %c0_28] : memref<1x128xf32, #tpu.memory_space<vmem>>, vector<1x128xf32>
    %37 = vector.broadcast %36 : vector<1x128xf32> to vector<128x128xf32>
    %38 = arith.addf %35, %37 : vector<128x128xf32>
    %cst_29 = arith.constant 0.000000e+00 : f32
    %39 = vector.broadcast %cst_29 : f32 to vector<128x128xf32>
    %40 = arith.maximumf %38, %39 : vector<128x128xf32>
    %41 = arith.truncf %40 : vector<128x128xf32> to vector<128x128xbf16>
    %c0_30 = arith.constant 0 : index
    %c0_31 = arith.constant 0 : index
    %42 = vector.load %arg12[%c0_30, %c0_31] : memref<128x128xbf16, #tpu.memory_space<vmem>>, vector<128x128xbf16>
    %cst_32 = arith.constant dense<0.000000e+00> : vector<128x128xf32>
    %43 = tpu.matmul %41, %42, %cst_32 {dimension_numbers = #tpu.dot_dimension_numbers<[1], [0], [0], [1], [0, 0, 1, 1], [], []>} : vector<128x128xbf16>, vector<128x128xbf16>, vector<128x128xf32> -> vector<128x128xf32>
    %c0_33 = arith.constant 0 : index
    %c0_34 = arith.constant 0 : index
    %44 = vector.load %arg13[%c0_33, %c0_34] : memref<1x128xf32, #tpu.memory_space<vmem>>, vector<1x128xf32>
    %45 = vector.broadcast %44 : vector<1x128xf32> to vector<128x128xf32>
    %46 = arith.addf %43, %45 : vector<128x128xf32>
    %c0_35 = arith.constant 0 : index
    %c0_36 = arith.constant 0 : index
    %47 = vector.load %arg14[%c0_35, %c0_36] : memref<128x128xf32, #tpu.memory_space<vmem>>, vector<128x128xf32>
    tpu.vector_store %arg14[%c0_35, %c0_36], %46 {strides = array<i32>} : memref<128x128xf32, #tpu.memory_space<vmem>>, vector<128x128xf32>,
    return
  }
  func.func @transform_0(%arg0: i32) -> (i32, i32) {
    %c0_i32 = arith.constant 0 : i32
    %c0_i32_0 = arith.constant 0 : i32
    return %arg0, %c0_i32 : i32, i32
  }
  func.func @transform_1(%arg0: i32) -> (i32, i32) {
    %c0_i32 = arith.constant 0 : i32
    %c0_i32_0 = arith.constant 0 : i32
    %c0_i32_1 = arith.constant 0 : i32
    return %c0_i32, %c0_i32_0 : i32, i32
  }
  func.func @transform_2(%arg0: i32) -> (i32, i32) {
    %c0_i32 = arith.constant 0 : i32
    %c0_i32_0 = arith.constant 0 : i32
    %c0_i32_1 = arith.constant 0 : i32
    return %c0_i32, %c0_i32_0 : i32, i32
  }
  func.func @transform_3(%arg0: i32) -> (i32, i32) {
    %c0_i32 = arith.constant 0 : i32
    %c0_i32_0 = arith.constant 0 : i32
    %c0_i32_1 = arith.constant 0 : i32
    return %c0_i32, %c0_i32_0 : i32, i32
  }
  func.func @transform_4(%arg0: i32) -> (i32, i32) {
    %c0_i32 = arith.constant 0 : i32
    %c0_i32_0 = arith.constant 0 : i32
    %c0_i32_1 = arith.constant 0 : i32
    return %c0_i32, %c0_i32_0 : i32, i32
  }
  func.func @transform_5(%arg0: i32) -> (i32, i32) {
    %c0_i32 = arith.constant 0 : i32
    %c0_i32_0 = arith.constant 0 : i32
    %c0_i32_1 = arith.constant 0 : i32
    return %c0_i32, %c0_i32_0 : i32, i32
  }
  func.func @transform_6(%arg0: i32) -> (i32, i32) {
    %c0_i32 = arith.constant 0 : i32
    %c0_i32_0 = arith.constant 0 : i32
    %c0_i32_1 = arith.constant 0 : i32
    return %c0_i32, %c0_i32_0 : i32, i32
  }
  func.func @transform_7(%arg0: i32) -> (i32, i32) {
    %c0_i32 = arith.constant 0 : i32
    %c0_i32_0 = arith.constant 0 : i32
    %c0_i32_1 = arith.constant 0 : i32
    return %c0_i32, %c0_i32_0 : i32, i32
  }
  func.func @transform_8(%arg0: i32) -> (i32, i32) {
    %c0_i32 = arith.constant 0 : i32
    %c0_i32_0 = arith.constant 0 : i32
    %c0_i32_1 = arith.constant 0 : i32
    return %c0_i32, %c0_i32_0 : i32, i32
  }
  func.func @transform_9(%arg0: i32) -> (i32, i32) {
    %c0_i32 = arith.constant 0 : i32
    %c0_i32_0 = arith.constant 0 : i32
    %c0_i32_1 = arith.constant 0 : i32
    return %c0_i32, %c0_i32_0 : i32, i32
  }
  func.func @transform_10(%arg0: i32) -> (i32, i32) {
    %c0_i32 = arith.constant 0 : i32
    %c0_i32_0 = arith.constant 0 : i32
    %c0_i32_1 = arith.constant 0 : i32
    return %c0_i32, %c0_i32_0 : i32, i32
  }
  func.func @transform_11(%arg0: i32) -> (i32, i32) {
    %c0_i32 = arith.constant 0 : i32
    %c0_i32_0 = arith.constant 0 : i32
    %c0_i32_1 = arith.constant 0 : i32
    return %c0_i32, %c0_i32_0 : i32, i32
  }
  func.func @transform_12(%arg0: i32) -> (i32, i32) {
    %c0_i32 = arith.constant 0 : i32
    %c0_i32_0 = arith.constant 0 : i32
    %c0_i32_1 = arith.constant 0 : i32
    return %c0_i32, %c0_i32_0 : i32, i32
  }
  func.func @transform_13(%arg0: i32) -> (i32, i32) {
    %c0_i32 = arith.constant 0 : i32
    %c0_i32_0 = arith.constant 0 : i32
    return %arg0, %c0_i32 : i32, i32
  }
}

</mosaic_0001>

<llo_original>
// kernel: tpu_custom_call.1
$region0: #{tpu_custom_call.1}
  #allocation0 [shape = 'u32[]', space=smem, size = 0x4, offset = 0x4, fixed_abs, tag = 'smem constant byte address 0x4 - core index']
  #allocation1 [shape = 'u32[144,128]{1,0:T(1,128)}', space=vmem, size = 0x12000, scoped, tag = 'internal scratch']
  %s0 = inlined_call_operand.vmem [shape: f32[256,48], index: 0, kind: input, shape index: {}]
  %s1 = inlined_call_operand.hbm [shape: bf16[48,192], index: 1, kind: input, shape index: {}]
  %s2 = inlined_call_operand.hbm [shape: f32[1,192], index: 2, kind: input, shape index: {}]
  %s3 = inlined_call_operand.vmem [shape: bf16[192,192], index: 3, kind: input, shape index: {}]
  %s4 = inlined_call_operand.hbm [shape: f32[1,192], index: 4, kind: input, shape index: {}]
  %s5 = inlined_call_operand.hbm [shape: bf16[192,512], index: 5, kind: input, shape index: {}]
  %s6 = inlined_call_operand.vmem [shape: f32[1,512], index: 6, kind: input, shape index: {}]
  %s7 = inlined_call_operand.hbm [shape: bf16[512,256], index: 7, kind: input, shape index: {}]
  %s8 = inlined_call_operand.hbm [shape: f32[1,256], index: 8, kind: input, shape index: {}]
  %s9 = inlined_call_operand.vmem [shape: bf16[256,128], index: 9, kind: input, shape index: {}]
  %s10 = inlined_call_operand.vmem [shape: f32[1,128], index: 10, kind: input, shape index: {}]
  %s11 = inlined_call_operand.vmem [shape: bf16[128,128], index: 11, kind: input, shape index: {}]
  %s12 = inlined_call_operand.vmem [shape: f32[1,128], index: 12, kind: input, shape index: {}]
  %s13 = inlined_call_operand.hbm [shape: f32[256,128], index: 13, kind: output, shape index: {}]
  %s14 = sld [smem:[#allocation0]]
  $region109: #{tpu_custom_call.1} parent=0
    _
  %s16 = ssub.s32 1, %s14
  %s17 = scalar_select 0, %s16, %s14
  $region1: #{tpu_custom_call.1} parent=0
    #allocation2 [shape = 'u8[24576]{0}', space=vmem, size = 0x6000, scoped, tag = 'input window, operand 1, single buffered']
    #allocation3 [shape = 's32[2]{0}', space=sflag, size = 0x8, scoped, tag = 'scoped memory for tpu_custom_call.1']
    #allocation4 [shape = 's32[2]{0}', space=sflag, size = 0x8, scoped, tag = 'scoped memory for tpu_custom_call.1']
    #allocation5 [shape = 'u8[1024]{0}', space=vmem, size = 0x400, scoped, tag = 'input window, operand 2, single buffered']
    #allocation6 [shape = 's32[1]{0}', space=sflag, size = 0x4, scoped, tag = 'scoped memory for tpu_custom_call.1']
    #allocation7 [shape = 'u8[1024]{0}', space=vmem, size = 0x400, scoped, tag = 'input window, operand 4, single buffered']
    #allocation8 [shape = 'u8[196608]{0}', space=vmem, size = 0x30000, scoped, tag = 'input window, operand 5, single buffered']
    #allocation9 [shape = 's32[1]{0}', space=sflag, size = 0x4, scoped, tag = 'scoped memory for tpu_custom_call.1']
    #allocation10 [shape = 'u8[262144]{0}', space=vmem, size = 0x40000, scoped, tag = 'input window, operand 7, single buffered']
    #allocation11 [shape = 'u8[1024]{0}', space=vmem, size = 0x400, scoped, tag = 'input window, operand 8, single buffered']
    #allocation12 [shape = 's32[1]{0}', space=sflag, size = 0x4, scoped, tag = 'scoped memory for tpu_custom_call.1']
    #allocation13 [shape = 'u8[131072]{0}', space=vmem, size = 0x20000, scoped, tag = 'output window, operand 0']
    %18 = vsyncpa [#allocation3], 0
    %19 = vsyncpa [#allocation6], 0
    %20 = vsyncpa [#allocation9], 0
    %21 = vsyncpa [#allocation12], 0
    %22 = vsyncpa [#allocation4], 0
    %s23 = scalar_lea.sflag [#allocation4], 1
    %24 = vsyncpa %s23, 0
    loop: start=0, step=1, limit=4
    $region2: #{tpu_custom_call.1} parent=1 // loop_pre_header
      _
    $region3: #{tpu_custom_call.1} parent=1 // loop_header
      %s26 = sphi 0, %s30
      %p27 = scmp.ge.s32.totalorder %s26, 4
      %s36 = sphi 0, %s38
      %s39 = sphi 0, %s36
      %s40 = sphi 0, %s39
      %s56 = sphi 0, %s40
      %s60 = sphi 0, %s60
      %s62 = sphi 0, %s60
      %s63 = sphi 0, %s62
      %s77 = sphi 0, %s63
      %s81 = sphi 0, %s81
      %s83 = sphi 0, %s81
      %s84 = sphi 0, %s83
      %s98 = sphi 0, %s84
      %s102 = sphi 0, %s102
      %s104 = sphi 0, %s102
      %s105 = sphi 0, %s104
      %s119 = sphi 0, %s105
      %s123 = sphi 0, %s123
      %s125 = sphi 0, %s123
      %s126 = sphi 0, %s125
      %s140 = sphi 0, %s126
      %s144 = sphi 0, %s144
      %s146 = sphi 0, %s144
      %s147 = sphi 0, %s146
      %s161 = sphi 0, %s147
      %s165 = sphi 0, %s165
      %s167 = sphi 0, %s165
      %s168 = sphi 0, %s167
      %s182 = sphi 0, %s168
      %s186 = sphi 0, %s186
      %s188 = sphi 0, %s186
      %s189 = sphi 0, %s188
      %s203 = sphi 0, %s189
      %s207 = sphi 0, %s207
      %s209 = sphi 0, %s207
      %s210 = sphi 0, %s209
      %s224 = sphi 0, %s210
      %s228 = sphi 0, %s228
      %s230 = sphi 0, %s228
      %s231 = sphi 0, %s230
      %s245 = sphi 0, %s231
      %s249 = sphi 0, %s249
      %s251 = sphi 0, %s249
      %s252 = sphi 0, %s251
      %s266 = sphi 0, %s252
      %s270 = sphi 0, %s270
      %s272 = sphi 0, %s270
      %s273 = sphi 0, %s272
      %s287 = sphi 0, %s273
      %s291 = sphi 0, %s291
      %s293 = sphi 0, %s291
      %s294 = sphi 0, %s293
      %s308 = sphi 0, %s294
      %s314 = sphi 0, %s316
      %s317 = sphi 0, %s314
      %s318 = sphi 0, %s317
      %s334 = sphi 0, %s318
    $region4: #{tpu_custom_call.1} parent=1 // loop_header_branch
      %29 = sbr.rel (%p27) target = $region8
    $region5: #{tpu_custom_call.1} parent=1 // loop_body
      %s31 = ssub.s32 %s26, 1
      %s32 = ssub.s32 %s26, 2
      %s33 = sadd.s32 %s26, 1
      %s34 = ssub.s32 %s26, %s33
      %p35 = scmp.eq.s32.totalorder %s34, 0
      %s37 = sadd.s32 %s36, 1
      %s38 = scalar_select %p35, %s36, %s37
      %p41 = pneg %p35
      %p42 = scmp.eq.s32.totalorder %s26, 1
      %p43 = por %p41, %p42
      %p44 = scmp.ne.s32.totalorder %s36, %s39
      %p45 = scmp.eq.s32.totalorder %s26, 0
      %p46 = por %p44, %p45
      %p47 = scmp.ne.s32.totalorder %s36, %s39
      %p48 = scmp.eq.s32.totalorder %s31, 1
      %p49 = por %p47, %p48
      %p50 = scmp.ne.s32.totalorder %s39, %s40
      %p51 = scmp.eq.s32.totalorder %s31, 0
      %p52 = por %p50, %p51
      %p53 = scmp.ne.s32.totalorder %s39, %s40
      %p54 = scmp.eq.s32.totalorder %s32, 1
      %p55 = por %p53, %p54
      %p57 = scmp.ne.s32.totalorder %s40, %s56
      %p58 = scmp.eq.s32.totalorder %s32, 0
      %p59 = por %p57, %p58
      %s61 = sadd.s32 %s60, 1
      %p64 = scmp.eq.s32.totalorder %s26, 1
      %p65 = scmp.ne.s32.totalorder %s60, %s62
      %p66 = scmp.eq.s32.totalorder %s26, 0
      %p67 = por %p65, %p66
      %p68 = scmp.ne.s32.totalorder %s60, %s62
      %p69 = scmp.eq.s32.totalorder %s31, 1
      %p70 = por %p68, %p69
      %p71 = scmp.ne.s32.totalorder %s62, %s63
      %p72 = scmp.eq.s32.totalorder %s31, 0
      %p73 = por %p71, %p72
      %p74 = scmp.ne.s32.totalorder %s62, %s63
      %p75 = scmp.eq.s32.totalorder %s32, 1
      %p76 = por %p74, %p75
      %p78 = scmp.ne.s32.totalorder %s63, %s77
      %p79 = scmp.eq.s32.totalorder %s32, 0
      %p80 = por %p78, %p79
      %s82 = sadd.s32 %s81, 1
      %p85 = scmp.eq.s32.totalorder %s26, 1
      %p86 = scmp.ne.s32.totalorder %s81, %s83
      %p87 = scmp.eq.s32.totalorder %s26, 0
      %p88 = por %p86, %p87
      %p89 = scmp.ne.s32.totalorder %s81, %s83
      %p90 = scmp.eq.s32.totalorder %s31, 1
      %p91 = por %p89, %p90
      %p92 = scmp.ne.s32.totalorder %s83, %s84
      %p93 = scmp.eq.s32.totalorder %s31, 0
      %p94 = por %p92, %p93
      %p95 = scmp.ne.s32.totalorder %s83, %s84
      %p96 = scmp.eq.s32.totalorder %s32, 1
      %p97 = por %p95, %p96
      %p99 = scmp.ne.s32.totalorder %s84, %s98
      %p100 = scmp.eq.s32.totalorder %s32, 0
      %p101 = por %p99, %p100
      %s103 = sadd.s32 %s102, 1
      %p106 = scmp.eq.s32.totalorder %s26, 1
      %p107 = scmp.ne.s32.totalorder %s102, %s104
      %p108 = scmp.eq.s32.totalorder %s26, 0
      %p109 = por %p107, %p108
      %p110 = scmp.ne.s32.totalorder %s102, %s104
      %p111 = scmp.eq.s32.totalorder %s31, 1
      %p112 = por %p110, %p111
      %p113 = scmp.ne.s32.totalorder %s104, %s105
      %p114 = scmp.eq.s32.totalorder %s31, 0
      %p115 = por %p113, %p114
      %p116 = scmp.ne.s32.totalorder %s104, %s105
      %p117 = scmp.eq.s32.totalorder %s32, 1
      %p118 = por %p116, %p117
      %p120 = scmp.ne.s32.totalorder %s105, %s119
      %p121 = scmp.eq.s32.totalorder %s32, 0
      %p122 = por %p120, %p121
      %s124 = sadd.s32 %s123, 1
      %p127 = scmp.eq.s32.totalorder %s26, 1
      %p128 = scmp.ne.s32.totalorder %s123, %s125
      %p129 = scmp.eq.s32.totalorder %s26, 0
      %p130 = por %p128, %p129
      %p131 = scmp.ne.s32.totalorder %s123, %s125
      %p132 = scmp.eq.s32.totalorder %s31, 1
      %p133 = por %p131, %p132
      %p134 = scmp.ne.s32.totalorder %s125, %s126
      %p135 = scmp.eq.s32.totalorder %s31, 0
      %p136 = por %p134, %p135
      %p137 = scmp.ne.s32.totalorder %s125, %s126
      %p138 = scmp.eq.s32.totalorder %s32, 1
      %p139 = por %p137, %p138
      %p141 = scmp.ne.s32.totalorder %s126, %s140
      %p142 = scmp.eq.s32.totalorder %s32, 0
      %p143 = por %p141, %p142
      %s145 = sadd.s32 %s144, 1
      %p148 = scmp.eq.s32.totalorder %s26, 1
      %p149 = scmp.ne.s32.totalorder %s144, %s146
      %p150 = scmp.eq.s32.totalorder %s26, 0
      %p151 = por %p149, %p150
      %p152 = scmp.ne.s32.totalorder %s144, %s146
      %p153 = scmp.eq.s32.totalorder %s31, 1
      %p154 = por %p152, %p153
      %p155 = scmp.ne.s32.totalorder %s146, %s147
      %p156 = scmp.eq.s32.totalorder %s31, 0
      %p157 = por %p155, %p156
      %p158 = scmp.ne.s32.totalorder %s146, %s147
      %p159 = scmp.eq.s32.totalorder %s32, 1
      %p160 = por %p158, %p159
      %p162 = scmp.ne.s32.totalorder %s147, %s161
      %p163 = scmp.eq.s32.totalorder %s32, 0
      %p164 = por %p162, %p163
      %s166 = sadd.s32 %s165, 1
      %p169 = scmp.eq.s32.totalorder %s26, 1
      %p170 = scmp.ne.s32.totalorder %s165, %s167
      %p171 = scmp.eq.s32.totalorder %s26, 0
      %p172 = por %p170, %p171
      %p173 = scmp.ne.s32.totalorder %s165, %s167
      %p174 = scmp.eq.s32.totalorder %s31, 1
      %p175 = por %p173, %p174
      %p176 = scmp.ne.s32.totalorder %s167, %s168
      %p177 = scmp.eq.s32.totalorder %s31, 0
      %p178 = por %p176, %p177
      %p179 = scmp.ne.s32.totalorder %s167, %s168
      %p180 = scmp.eq.s32.totalorder %s32, 1
      %p181 = por %p179, %p180
      %p183 = scmp.ne.s32.totalorder %s168, %s182
      %p184 = scmp.eq.s32.totalorder %s32, 0
      %p185 = por %p183, %p184
      %s187 = sadd.s32 %s186, 1
      %p190 = scmp.eq.s32.totalorder %s26, 1
      %p191 = scmp.ne.s32.totalorder %s186, %s188
      %p192 = scmp.eq.s32.totalorder %s26, 0
      %p193 = por %p191, %p192
      %p194 = scmp.ne.s32.totalorder %s186, %s188
      %p195 = scmp.eq.s32.totalorder %s31, 1
      %p196 = por %p194, %p195
      %p197 = scmp.ne.s32.totalorder %s188, %s189
      %p198 = scmp.eq.s32.totalorder %s31, 0
      %p199 = por %p197, %p198
      %p200 = scmp.ne.s32.totalorder %s188, %s189
      %p201 = scmp.eq.s32.totalorder %s32, 1
      %p202 = por %p200, %p201
      %p204 = scmp.ne.s32.totalorder %s189, %s203
      %p205 = scmp.eq.s32.totalorder %s32, 0
      %p206 = por %p204, %p205
      %s208 = sadd.s32 %s207, 1
      %p211 = scmp.eq.s32.totalorder %s26, 1
      %p212 = scmp.ne.s32.totalorder %s207, %s209
      %p213 = scmp.eq.s32.totalorder %s26, 0
      %p214 = por %p212, %p213
      %p215 = scmp.ne.s32.totalorder %s207, %s209
      %p216 = scmp.eq.s32.totalorder %s31, 1
      %p217 = por %p215, %p216
      %p218 = scmp.ne.s32.totalorder %s209, %s210
      %p219 = scmp.eq.s32.totalorder %s31, 0
      %p220 = por %p218, %p219
      %p221 = scmp.ne.s32.totalorder %s209, %s210
      %p222 = scmp.eq.s32.totalorder %s32, 1
      %p223 = por %p221, %p222
      %p225 = scmp.ne.s32.totalorder %s210, %s224
      %p226 = scmp.eq.s32.totalorder %s32, 0
      %p227 = por %p225, %p226
      %s229 = sadd.s32 %s228, 1
      %p232 = scmp.eq.s32.totalorder %s26, 1
      %p233 = scmp.ne.s32.totalorder %s228, %s230
      %p234 = scmp.eq.s32.totalorder %s26, 0
      %p235 = por %p233, %p234
      %p236 = scmp.ne.s32.totalorder %s228, %s230
      %p237 = scmp.eq.s32.totalorder %s31, 1
      %p238 = por %p236, %p237
      %p239 = scmp.ne.s32.totalorder %s230, %s231
      %p240 = scmp.eq.s32.totalorder %s31, 0
      %p241 = por %p239, %p240
      %p242 = scmp.ne.s32.totalorder %s230, %s231
      %p243 = scmp.eq.s32.totalorder %s32, 1
      %p244 = por %p242, %p243
      %p246 = scmp.ne.s32.totalorder %s231, %s245
      %p247 = scmp.eq.s32.totalorder %s32, 0
      %p248 = por %p246, %p247
      %s250 = sadd.s32 %s249, 1
      %p253 = scmp.eq.s32.totalorder %s26, 1
      %p254 = scmp.ne.s32.totalorder %s249, %s251
      %p255 = scmp.eq.s32.totalorder %s26, 0
      %p256 = por %p254, %p255
      %p257 = scmp.ne.s32.totalorder %s249, %s251
      %p258 = scmp.eq.s32.totalorder %s31, 1
      %p259 = por %p257, %p258
      %p260 = scmp.ne.s32.totalorder %s251, %s252
      %p261 = scmp.eq.s32.totalorder %s31, 0
      %p262 = por %p260, %p261
      %p263 = scmp.ne.s32.totalorder %s251, %s252
      %p264 = scmp.eq.s32.totalorder %s32, 1
      %p265 = por %p263, %p264
      %p267 = scmp.ne.s32.totalorder %s252, %s266
      %p268 = scmp.eq.s32.totalorder %s32, 0
      %p269 = por %p267, %p268
      %s271 = sadd.s32 %s270, 1
      %p274 = scmp.eq.s32.totalorder %s26, 1
      %p275 = scmp.ne.s32.totalorder %s270, %s272
      %p276 = scmp.eq.s32.totalorder %s26, 0
      %p277 = por %p275, %p276
      %p278 = scmp.ne.s32.totalorder %s270, %s272
      %p279 = scmp.eq.s32.totalorder %s31, 1
      %p280 = por %p278, %p279
      %p281 = scmp.ne.s32.totalorder %s272, %s273
      %p282 = scmp.eq.s32.totalorder %s31, 0
      %p283 = por %p281, %p282
      %p284 = scmp.ne.s32.totalorder %s272, %s273
      %p285 = scmp.eq.s32.totalorder %s32, 1
      %p286 = por %p284, %p285
      %p288 = scmp.ne.s32.totalorder %s273, %s287
      %p289 = scmp.eq.s32.totalorder %s32, 0
      %p290 = por %p288, %p289
      %s292 = sadd.s32 %s291, 1
      %p295 = scmp.eq.s32.totalorder %s26, 1
      %p296 = scmp.ne.s32.totalorder %s291, %s293
      %p297 = scmp.eq.s32.totalorder %s26, 0
      %p298 = por %p296, %p297
      %p299 = scmp.ne.s32.totalorder %s291, %s293
      %p300 = scmp.eq.s32.totalorder %s31, 1
      %p301 = por %p299, %p300
      %p302 = scmp.ne.s32.totalorder %s293, %s294
      %p303 = scmp.eq.s32.totalorder %s31, 0
      %p304 = por %p302, %p303
      %p305 = scmp.ne.s32.totalorder %s293, %s294
      %p306 = scmp.eq.s32.totalorder %s32, 1
      %p307 = por %p305, %p306
      %p309 = scmp.ne.s32.totalorder %s294, %s308
      %p310 = scmp.eq.s32.totalorder %s32, 0
      %p311 = por %p309, %p310
      %s312 = ssub.s32 %s26, %s33
      %p313 = scmp.eq.s32.totalorder %s312, 0
      %s315 = sadd.s32 %s314, 1
      %s316 = scalar_select %p313, %s314, %s315
      %p319 = pneg %p313
      %p320 = scmp.eq.s32.totalorder %s26, 1
      %p321 = por %p319, %p320
      %p322 = scmp.ne.s32.totalorder %s314, %s317
      %p323 = scmp.eq.s32.totalorder %s26, 0
      %p324 = por %p322, %p323
      %p325 = scmp.ne.s32.totalorder %s314, %s317
      %p326 = scmp.eq.s32.totalorder %s31, 1
      %p327 = por %p325, %p326
      %p328 = scmp.ne.s32.totalorder %s317, %s318
      %p329 = scmp.eq.s32.totalorder %s31, 0
      %p330 = por %p328, %p329
      %p331 = scmp.ne.s32.totalorder %s317, %s318
      %p332 = scmp.eq.s32.totalorder %s32, 1
      %p333 = por %p331, %p332
      %p335 = scmp.ne.s32.totalorder %s318, %s334
      %p336 = scmp.eq.s32.totalorder %s32, 0
      %p337 = por %p335, %p336
      %p338 = scmp.le.s32.totalorder 1, %s26
      %p339 = scmp.lt.s32.totalorder %s26, 3
      %p340 = pnand %p338, %p339
      %p341 = pneg %p340
      // Predicated region
      $region9: #{tpu_custom_call.1} parent=5 // pred_check
        _
      $region10: #{tpu_custom_call.1} parent=5 // pred_check_branch
        %343 = sbr.rel (%p340) target = $region12
      $region11: #{tpu_custom_call.1} parent=5 // pred_region
        %s344 = ssub.s32 %s26, 1
        // Predicated region
        $region13: #{tpu_custom_call.1} parent=11 // pred_check
          %p345 = pneg %p73
        $region14: #{tpu_custom_call.1} parent=11 // pred_check_branch
          %347 = sbr.rel (%p345) target = $region16
        $region15: #{tpu_custom_call.1} parent=11 // pred_region
          %s349 = ssub.s32 768, 768
          %350 = vsyncadd [#allocation3], %s349
          %s351 = sshll.u32 [#allocation2], 4
          %s352 = int_to_ptr.vmem [resolvable:$true] %s351
          %357 = dma.hbm_to_vmem [thread:$0]  %s1, 768, %s352, [#allocation3], 128, 128, 8
        $region16: #{tpu_custom_call.1} parent=11 // pred_fallthru
          _
        // Predicated region
        $region17: #{tpu_custom_call.1} parent=11 // pred_check
          %p358 = pneg %p94
        $region18: #{tpu_custom_call.1} parent=11 // pred_check_branch
          %360 = sbr.rel (%p358) target = $region20
        $region19: #{tpu_custom_call.1} parent=11 // pred_region
          %s362 = ssub.s32 32, 32
          %363 = vsyncadd [#allocation6], %s362
          %s365 = sshll.u32 [#allocation5], 4
          %s366 = int_to_ptr.vmem [resolvable:$true] %s365
          %368 = dma.hbm_to_vmem [thread:$0]  %s2, 32, %s366, [#allocation6]
        $region20: #{tpu_custom_call.1} parent=11 // pred_fallthru
          _
        // Predicated region
        $region21: #{tpu_custom_call.1} parent=11 // pred_check
          %p369 = pneg %p115
        $region22: #{tpu_custom_call.1} parent=11 // pred_check_branch
          %371 = sbr.rel (%p369) target = $region24
        $region23: #{tpu_custom_call.1} parent=11 // pred_region
          _
        $region24: #{tpu_custom_call.1} parent=11 // pred_fallthru
          _
        // Predicated region
        $region25: #{tpu_custom_call.1} parent=11 // pred_check
          %p372 = pneg %p136
        $region26: #{tpu_custom_call.1} parent=11 // pred_check_branch
          %374 = sbr.rel (%p372) target = $region28
        $region27: #{tpu_custom_call.1} parent=11 // pred_region
          %s376 = ssub.s32 32, 32
          %377 = vsyncadd [#allocation6], %s376
          %s379 = sshll.u32 [#allocation7], 4
          %s380 = int_to_ptr.vmem [resolvable:$true] %s379
          %382 = dma.hbm_to_vmem [thread:$0]  %s4, 32, %s380, [#allocation6]
        $region28: #{tpu_custom_call.1} parent=11 // pred_fallthru
          _
        // Predicated region
        $region29: #{tpu_custom_call.1} parent=11 // pred_check
          %p383 = pneg %p157
        $region30: #{tpu_custom_call.1} parent=11 // pred_check_branch
          %385 = sbr.rel (%p383) target = $region32
        $region31: #{tpu_custom_call.1} parent=11 // pred_region
          %s387 = ssub.s32 6144, 6144
          %388 = vsyncadd [#allocation9], %s387
          %s389 = sshll.u32 [#allocation8], 4
          %s390 = int_to_ptr.vmem [resolvable:$true] %s389
          %395 = dma.hbm_to_vmem [thread:$0]  %s5, 6144, %s390, [#allocation9], 256, 256, 16
        $region32: #{tpu_custom_call.1} parent=11 // pred_fallthru
          _
        // Predicated region
        $region33: #{tpu_custom_call.1} parent=11 // pred_check
          %p396 = pneg %p178
        $region34: #{tpu_custom_call.1} parent=11 // pred_check_branch
          %398 = sbr.rel (%p396) target = $region36
        $region35: #{tpu_custom_call.1} parent=11 // pred_region
          _
        $region36: #{tpu_custom_call.1} parent=11 // pred_fallthru
          _
        // Predicated region
        $region37: #{tpu_custom_call.1} parent=11 // pred_check
          %p399 = pneg %p199
        $region38: #{tpu_custom_call.1} parent=11 // pred_check_branch
          %401 = sbr.rel (%p399) target = $region40
        $region39: #{tpu_custom_call.1} parent=11 // pred_region
          %s403 = ssub.s32 8192, 8192
          %404 = vsyncadd [#allocation9], %s403
          %s405 = sshll.u32 [#allocation10], 4
          %s406 = int_to_ptr.vmem [resolvable:$true] %s405
          %411 = dma.hbm_to_vmem [thread:$0]  %s7, 8192, %s406, [#allocation9], 128, 128, 8
        $region40: #{tpu_custom_call.1} parent=11 // pred_fallthru
          _
        // Predicated region
        $region41: #{tpu_custom_call.1} parent=11 // pred_check
          %p412 = pneg %p220
        $region42: #{tpu_custom_call.1} parent=11 // pred_check_branch
          %414 = sbr.rel (%p412) target = $region44
        $region43: #{tpu_custom_call.1} parent=11 // pred_region
          %s416 = ssub.s32 32, 32
          %417 = vsyncadd [#allocation12], %s416
          %s419 = sshll.u32 [#allocation11], 4
          %s420 = int_to_ptr.vmem [resolvable:$true] %s419
          %422 = dma.hbm_to_vmem [thread:$0]  %s8, 32, %s420, [#allocation12]
        $region44: #{tpu_custom_call.1} parent=11 // pred_fallthru
          _
        // Predicated region
        $region45: #{tpu_custom_call.1} parent=11 // pred_check
          %p423 = pneg %p241
        $region46: #{tpu_custom_call.1} parent=11 // pred_check_branch
          %425 = sbr.rel (%p423) target = $region48
        $region47: #{tpu_custom_call.1} parent=11 // pred_region
          _
        $region48: #{tpu_custom_call.1} parent=11 // pred_fallthru
          _
        // Predicated region
        $region49: #{tpu_custom_call.1} parent=11 // pred_check
          %p426 = pneg %p262
        $region50: #{tpu_custom_call.1} parent=11 // pred_check_branch
          %428 = sbr.rel (%p426) target = $region52
        $region51: #{tpu_custom_call.1} parent=11 // pred_region
          _
        $region52: #{tpu_custom_call.1} parent=11 // pred_fallthru
          _
        // Predicated region
        $region53: #{tpu_custom_call.1} parent=11 // pred_check
          %p429 = pneg %p283
        $region54: #{tpu_custom_call.1} parent=11 // pred_check_branch
          %431 = sbr.rel (%p429) target = $region56
        $region55: #{tpu_custom_call.1} parent=11 // pred_region
          _
        $region56: #{tpu_custom_call.1} parent=11 // pred_fallthru
          _
        // Predicated region
        $region57: #{tpu_custom_call.1} parent=11 // pred_check
          %p432 = pneg %p304
        $region58: #{tpu_custom_call.1} parent=11 // pred_check_branch
          %434 = sbr.rel (%p432) target = $region60
        $region59: #{tpu_custom_call.1} parent=11 // pred_region
          _
        $region60: #{tpu_custom_call.1} parent=11 // pred_fallthru
          _
      $region12: #{tpu_custom_call.1} parent=5 // pred_fallthru
        _
      %p435 = scmp.lt.s32.totalorder %s26, 2
      // Predicated region
      $region61: #{tpu_custom_call.1} parent=5 // pred_check
        %p436 = pneg %p435
      $region62: #{tpu_custom_call.1} parent=5 // pred_check_branch
        %438 = sbr.rel (%p436) target = $region64
      $region63: #{tpu_custom_call.1} parent=5 // pred_region
        // Predicated region
        $region65: #{tpu_custom_call.1} parent=63 // pred_check
          %p439 = pneg %p46
        $region66: #{tpu_custom_call.1} parent=63 // pred_check_branch
          %441 = sbr.rel (%p439) target = $region68
        $region67: #{tpu_custom_call.1} parent=63 // pred_region
          %s442 = smul.u32 16, %s26
          %p443 = scmp.lt.s32.totalorder %s442, 31
          %s444 = scalar_select %p443, %s442, 31
          %s445 = smul.addr %s444, 8
          %s446 = scalar_lea.vmem %s0, %s445
          %s447 = smul.u32 16, %s26
        $region68: #{tpu_custom_call.1} parent=63 // pred_fallthru
          _
      $region64: #{tpu_custom_call.1} parent=5 // pred_fallthru
        _
      %p448 = scmp.le.s32.totalorder 1, %s26
      %p449 = scmp.lt.s32.totalorder %s26, 3
      %p450 = pnand %p448, %p449
      %p451 = pneg %p450
      // Predicated region
      $region69: #{tpu_custom_call.1} parent=5 // pred_check
        _
      $region70: #{tpu_custom_call.1} parent=5 // pred_check_branch
        %453 = sbr.rel (%p450) target = $region72
      $region71: #{tpu_custom_call.1} parent=5 // pred_region
        %s454 = ssub.s32 %s26, 1
        // Predicated region
        $region73: #{tpu_custom_call.1} parent=71 // pred_check
          %p455 = pneg %p73
        $region74: #{tpu_custom_call.1} parent=71 // pred_check_branch
          %457 = sbr.rel (%p455) target = $region76
        $region75: #{tpu_custom_call.1} parent=71 // pred_region
          %458 = dma.done [#allocation3], 768
        $region76: #{tpu_custom_call.1} parent=71 // pred_fallthru
          _
        // Predicated region
        $region77: #{tpu_custom_call.1} parent=71 // pred_check
          %p459 = pneg %p94
        $region78: #{tpu_custom_call.1} parent=71 // pred_check_branch
          %461 = sbr.rel (%p459) target = $region80
        $region79: #{tpu_custom_call.1} parent=71 // pred_region
          %462 = dma.done [#allocation6], 32
        $region80: #{tpu_custom_call.1} parent=71 // pred_fallthru
          _
        // Predicated region
        $region81: #{tpu_custom_call.1} parent=71 // pred_check
          %p463 = pneg %p136
        $region82: #{tpu_custom_call.1} parent=71 // pred_check_branch
          %465 = sbr.rel (%p463) target = $region84
        $region83: #{tpu_custom_call.1} parent=71 // pred_region
          %466 = dma.done [#allocation6], 32
        $region84: #{tpu_custom_call.1} parent=71 // pred_fallthru
          _
        // Predicated region
        $region85: #{tpu_custom_call.1} parent=71 // pred_check
          %p467 = pneg %p157
        $region86: #{tpu_custom_call.1} parent=71 // pred_check_branch
          %469 = sbr.rel (%p467) target = $region88
        $region87: #{tpu_custom_call.1} parent=71 // pred_region
          %470 = dma.done [#allocation9], 6144
        $region88: #{tpu_custom_call.1} parent=71 // pred_fallthru
          _
        // Predicated region
        $region89: #{tpu_custom_call.1} parent=71 // pred_check
          %p471 = pneg %p199
        $region90: #{tpu_custom_call.1} parent=71 // pred_check_branch
          %473 = sbr.rel (%p471) target = $region92
        $region91: #{tpu_custom_call.1} parent=71 // pred_region
          %474 = dma.done [#allocation9], 8192
        $region92: #{tpu_custom_call.1} parent=71 // pred_fallthru
          _
        // Predicated region
        $region93: #{tpu_custom_call.1} parent=71 // pred_check
          %p475 = pneg %p220
        $region94: #{tpu_custom_call.1} parent=71 // pred_check_branch
          %477 = sbr.rel (%p475) target = $region96
        $region95: #{tpu_custom_call.1} parent=71 // pred_region
          %478 = dma.done [#allocation12], 32
        $region96: #{tpu_custom_call.1} parent=71 // pred_fallthru
          _
        %s479 = smul.u32 16, %s31
        %p480 = scmp.lt.s32.totalorder %s479, 31
        %s481 = scalar_select %p480, %s479, 31
        %s482 = smul.addr %s481, 8
        %s483 = scalar_lea.vmem %s0, %s482
        %p484 = pneg %p52
        %p485 = pneg %p49
        %p486 = pneg %p73
        %p487 = pneg %p70
        %p488 = pneg %p94
        %p489 = pneg %p91
        %p490 = pneg %p115
        %p491 = pneg %p112
        %p492 = pneg %p136
        %p493 = pneg %p133
        %p494 = pneg %p157
        %p495 = pneg %p154
        %p496 = pneg %p178
        %p497 = pneg %p175
        %p498 = pneg %p199
        %p499 = pneg %p196
        %p500 = pneg %p220
        %p501 = pneg %p217
        %p502 = pneg %p241
        %p503 = pneg %p238
        %p504 = pneg %p262
        %p505 = pneg %p259
        %p506 = pneg %p283
        %p507 = pneg %p280
        %p508 = pneg %p304
        %p509 = pneg %p301
        %p510 = pneg %p330
        %p511 = pneg %p327
        %s512 = sand.u32 %s317, 1
        %s513 = scalar_lea.sflag [#allocation4], %s512
        %s514 = sand.u32 %s317, 1
        %s515 = smul.addr %s514, 128
        %s516 = scalar_lea.vmem [#allocation13], %s515
        %s517 = smul.u32 16, %s31
        %p518 = scmp.lt.s32.totalorder %s517, 31
        %s519 = scalar_select %p518, %s517, 31
        %s520 = smul.addr %s519, 8
        %s521 = scalar_lea.vmem %s0, %s520
        %s522 = smul.u32 16, %s31
        %s523 = smul.u32 16, %s31
        %v525 = vld [vmem:[%s521] sm:$0xff]
        %v526 = vld [vmem:[%s521 + $0x8] sm:$0xff]
        %v527 = vld [vmem:[%s521 + $0x10] sm:$0xff]
        %v528 = vld [vmem:[%s521 + $0x18] sm:$0xff]
        %v529 = vld [vmem:[%s521 + $0x20] sm:$0xff]
        %v530 = vld [vmem:[%s521 + $0x28] sm:$0xff]
        %v531 = vld [vmem:[%s521 + $0x30] sm:$0xff]
        %v532 = vld [vmem:[%s521 + $0x38] sm:$0xff]
        %v533 = vld [vmem:[%s521 + $0x40] sm:$0xff]
        %v534 = vld [vmem:[%s521 + $0x48] sm:$0xff]
        %v535 = vld [vmem:[%s521 + $0x50] sm:$0xff]
        %v536 = vld [vmem:[%s521 + $0x58] sm:$0xff]
        %v537 = vld [vmem:[%s521 + $0x60] sm:$0xff]
        %v538 = vld [vmem:[%s521 + $0x68] sm:$0xff]
        %v539 = vld [vmem:[%s521 + $0x70] sm:$0xff]
        %v540 = vld [vmem:[%s521 + $0x78] sm:$0xff]
        %v541 = vpack.c.bf16 %v526, %v525
        %v542 = vpack.c.bf16 %v528, %v527
        %v543 = vpack.c.bf16 %v530, %v529
        %v544 = vpack.c.bf16 %v532, %v531
        %v545 = vpack.c.bf16 %v534, %v533
        %v546 = vpack.c.bf16 %v536, %v535
        %v547 = vpack.c.bf16 %v538, %v537
        %v548 = vpack.c.bf16 %v540, %v539
        %v549 = vld [vmem:[#allocation2] sm:$0xff]
        %v550 = vld [vmem:[#allocation2 + $0x8] sm:$0xff]
        %v551 = vld [vmem:[#allocation2 + $0x10] sm:$0xff]
        %v552 = vld [vmem:[#allocation2 + $0x18] sm:$0xff]
        %v553 = vld [vmem:[#allocation2 + $0x20] sm:$0xff]
        %v554 = vld [vmem:[#allocation2 + $0x28] sm:$0xff]
        %v555 = vld [vmem:[#allocation5] sm:$0x3]
        %v557 = vlaneseq
        %v558 = vshrl.u32 %v557, 7
        %v559 = vsub.s32 0, %v558
        %v560 = vrot.slane %v555, %v559
        %v561 = vlaneseq
        %v562 = vshrl.u32 %v561, 7
        %v563 = vsub.s32 1, %v562
        %v564 = vrot.slane %v555, %v563
        %v573 = vunpack.c.l.b16 %v549
        %v574 = vunpack.c.h.b16 %v549
        %v575 = vunpack.c.l.b16 %v550
        %v576 = vunpack.c.h.b16 %v550
        %v577 = vunpack.c.l.b16 %v551
        %v578 = vunpack.c.h.b16 %v551
        %v579 = vunpack.c.l.b16 %v552
        %v580 = vunpack.c.h.b16 %v552
        %v581 = vunpack.c.l.b16 %v553
        %v582 = vunpack.c.h.b16 %v553
        %v583 = vunpack.c.l.b16 %v554
        %v584 = vunpack.c.h.b16 %v554
        %v585 = vpack.c.b16 %v575, %v573
        %v586 = vpack.c.b16 %v576, %v574
        %v587 = vpack.c.b16 %v579, %v577
        %v588 = vpack.c.b16 %v580, %v578
        %v589 = vpack.c.b16 %v583, %v581
        %v590 = vpack.c.b16 %v584, %v582
        %vm597 = vcmask 392192
        %v599 = vsel %vm597, %v541, 0
        %v602 = vsel %vm597, %v542, 0
        %v605 = vsel %vm597, %v543, 0
        %v608 = vsel %vm597, %v544, 0
        %v611 = vsel %vm597, %v545, 0
        %v614 = vsel %vm597, %v546, 0
        %v617 = vsel %vm597, %v547, 0
        %v620 = vsel %vm597, %v548, 0
        %622 = vmatprep.subr.bf16.mxu0 %v586
        %623 = vmatpush1.bf16.msra.mxu0 %v585
        %624 = vmatprep.subr.bf16.mxu0 %v588
        %625 = vmatpush1.bf16.msra.mxu0 %v587
        %626 = vmatprep.subr.bf16.mxu0 %v590
        %627 = vmatpush1.bf16.msra.mxu0 %v589
        %628 = vmatprep.subr.bf16.mxu0 0
        %629 = vmatpush1.bf16.msra.mxu0 0
        %630 = vmatprep.subr.bf16.mxu0 0
        %631 = vmatpush1.bf16.msra.mxu0 0
        %632 = vmatprep.subr.bf16.mxu0 0
        %633 = vmatpush1.bf16.msra.mxu0 0
        %634 = vmatprep.subr.bf16.mxu0 0
        %635 = vmatpush1.bf16.msra.mxu0 0
        %636 = vmatprep.subr.bf16.mxu0 0
        %637 = vmatpush1.bf16.msra.mxu0 0
        %638 = vmatprep.subr.bf16.mxu0 0
        %639 = vmatpush1.bf16.msra.mxu0 0
        %640 = vmatprep.subr.bf16.mxu0 0
        %641 = vmatpush1.bf16.msra.mxu0 0
        %642 = vmatprep.subr.bf16.mxu0 0
        %643 = vmatpush1.bf16.msra.mxu0 0
        %644 = vmatprep.subr.bf16.mxu0 0
        %645 = vmatpush1.bf16.msra.mxu0 0
        %646 = vmatprep.subr.bf16.mxu0 0
        %647 = vmatpush1.bf16.msra.mxu0 0
        %648 = vmatprep.subr.bf16.mxu0 0
        %649 = vmatpush1.bf16.msra.mxu0 0
        %650 = vmatprep.subr.bf16.mxu0 0
        %651 = vmatpush1.bf16.msra.mxu0 0
        %652 = vmatprep.subr.bf16.mxu0 0
        %653 = vmatpush1.bf16.msra.mxu0 0
        %654 = vmatprep.mubr.bf16.mxu0 0
        %655 = vmatmul.mubr.bf16.gmra.mrb[0].mxu0 %v599
        %v656 = vpop.f32.mrb[0].mxu0
        %v657 = vadd.f32 %v560, %v656
        %v658 = vpop.f32.mrb[0].mxu0
        %v659 = vadd.f32 %v564, %v658
        %v660 = vpop.f32.mrb[0].mxu0
        %v661 = vadd.f32 %v560, %v660
        %v662 = vpop.f32.mrb[0].mxu0
        %v663 = vadd.f32 %v564, %v662
        %664 = vmatprep.mubr.bf16.mxu0 0
        %665 = vmatmul.mubr.bf16.gmra.mrb[0].mxu0 %v602
        %v666 = vpop.f32.mrb[0].mxu0
        %v667 = vadd.f32 %v560, %v666
        %v668 = vpop.f32.mrb[0].mxu0
        %v669 = vadd.f32 %v564, %v668
        %v670 = vpop.f32.mrb[0].mxu0
        %v671 = vadd.f32 %v560, %v670
        %v672 = vpop.f32.mrb[0].mxu0
        %v673 = vadd.f32 %v564, %v672
        %674 = vmatprep.mubr.bf16.mxu0 0
        %675 = vmatmul.mubr.bf16.gmra.mrb[0].mxu0 %v605
        %v676 = vpop.f32.mrb[0].mxu0
        %v677 = vadd.f32 %v560, %v676
        %v678 = vpop.f32.mrb[0].mxu0
        %v679 = vadd.f32 %v564, %v678
        %v680 = vpop.f32.mrb[0].mxu0
        %v681 = vadd.f32 %v560, %v680
        %v682 = vpop.f32.mrb[0].mxu0
        %v683 = vadd.f32 %v564, %v682
        %684 = vmatprep.mubr.bf16.mxu0 0
        %685 = vmatmul.mubr.bf16.gmra.mrb[0].mxu0 %v608
        %v686 = vpop.f32.mrb[0].mxu0
        %v687 = vadd.f32 %v560, %v686
        %v688 = vpop.f32.mrb[0].mxu0
        %v689 = vadd.f32 %v564, %v688
        %v690 = vpop.f32.mrb[0].mxu0
        %v691 = vadd.f32 %v560, %v690
        %v692 = vpop.f32.mrb[0].mxu0
        %v693 = vadd.f32 %v564, %v692
        %694 = vmatprep.mubr.bf16.mxu0 0
        %695 = vmatmul.mubr.bf16.gmra.mrb[0].mxu0 %v611
        %v696 = vpop.f32.mrb[0].mxu0
        %v697 = vadd.f32 %v560, %v696
        %v698 = vpop.f32.mrb[0].mxu0
        %v699 = vadd.f32 %v564, %v698
        %v700 = vpop.f32.mrb[0].mxu0
        %v701 = vadd.f32 %v560, %v700
        %v702 = vpop.f32.mrb[0].mxu0
        %v703 = vadd.f32 %v564, %v702
        %704 = vmatprep.mubr.bf16.mxu0 0
        %705 = vmatmul.mubr.bf16.gmra.mrb[0].mxu0 %v614
        %v706 = vpop.f32.mrb[0].mxu0
        %v707 = vadd.f32 %v560, %v706
        %v708 = vpop.f32.mrb[0].mxu0
        %v709 = vadd.f32 %v564, %v708
        %v710 = vpop.f32.mrb[0].mxu0
        %v711 = vadd.f32 %v560, %v710
        %v712 = vpop.f32.mrb[0].mxu0
        %v713 = vadd.f32 %v564, %v712
        %714 = vmatprep.mubr.bf16.mxu0 0
        %715 = vmatmul.mubr.bf16.gmra.mrb[0].mxu0 %v617
        %v716 = vpop.f32.mrb[0].mxu0
        %v717 = vadd.f32 %v560, %v716
        %v718 = vpop.f32.mrb[0].mxu0
        %v719 = vadd.f32 %v564, %v718
        %v720 = vpop.f32.mrb[0].mxu0
        %v721 = vadd.f32 %v560, %v720
        %v722 = vpop.f32.mrb[0].mxu0
        %v723 = vadd.f32 %v564, %v722
        %724 = vmatprep.mubr.bf16.mxu0 0
        %725 = vmatmul.mubr.bf16.gmra.mrb[0].mxu0 %v620
        %v726 = vpop.f32.mrb[0].mxu0
        %v727 = vadd.f32 %v560, %v726
        %v728 = vpop.f32.mrb[0].mxu0
        %v729 = vadd.f32 %v564, %v728
        %v730 = vpop.f32.mrb[0].mxu0
        %v731 = vadd.f32 %v560, %v730
        %v732 = vpop.f32.mrb[0].mxu0
        %v733 = vadd.f32 %v564, %v732
        %734 = vdwg.mxu0
        %v735 = vmax.f32 %v657, 0.0
        %v736 = vmax.f32 %v659, 0.0
        %v737 = vmax.f32 %v661, 0.0
        %v738 = vmax.f32 %v663, 0.0
        %v739 = vmax.f32 %v667, 0.0
        %v740 = vmax.f32 %v669, 0.0
        %v741 = vmax.f32 %v671, 0.0
        %v742 = vmax.f32 %v673, 0.0
        %v743 = vmax.f32 %v677, 0.0
        %v744 = vmax.f32 %v679, 0.0
        %v745 = vmax.f32 %v681, 0.0
        %v746 = vmax.f32 %v683, 0.0
        %v747 = vmax.f32 %v687, 0.0
        %v748 = vmax.f32 %v689, 0.0
        %v749 = vmax.f32 %v691, 0.0
        %v750 = vmax.f32 %v693, 0.0
        %v751 = vmax.f32 %v697, 0.0
        %v752 = vmax.f32 %v699, 0.0
        %v753 = vmax.f32 %v701, 0.0
        %v754 = vmax.f32 %v703, 0.0
        %v755 = vmax.f32 %v707, 0.0
        %v756 = vmax.f32 %v709, 0.0
        %v757 = vmax.f32 %v711, 0.0
        %v758 = vmax.f32 %v713, 0.0
        %v759 = vmax.f32 %v717, 0.0
        %v760 = vmax.f32 %v719, 0.0
        %v761 = vmax.f32 %v721, 0.0
        %v762 = vmax.f32 %v723, 0.0
        %v763 = vmax.f32 %v727, 0.0
        %v764 = vmax.f32 %v729, 0.0
        %v765 = vmax.f32 %v731, 0.0
        %v766 = vmax.f32 %v733, 0.0
        %v767 = vpack.c.bf16 %v737, %v735
        %v768 = vpack.c.bf16 %v738, %v736
        %v769 = vpack.c.bf16 %v741, %v739
        %v770 = vpack.c.bf16 %v742, %v740
        %v771 = vpack.c.bf16 %v745, %v743
        %v772 = vpack.c.bf16 %v746, %v744
        %v773 = vpack.c.bf16 %v749, %v747
        %v774 = vpack.c.bf16 %v750, %v748
        %v775 = vpack.c.bf16 %v753, %v751
        %v776 = vpack.c.bf16 %v754, %v752
        %v777 = vpack.c.bf16 %v757, %v755
        %v778 = vpack.c.bf16 %v758, %v756
        %v779 = vpack.c.bf16 %v761, %v759
        %v780 = vpack.c.bf16 %v762, %v760
        %v781 = vpack.c.bf16 %v765, %v763
        %v782 = vpack.c.bf16 %v766, %v764
        %v783 = vld [vmem:[%s3] sm:$0xff]
        %v784 = vld [vmem:[%s3 + $0x8] sm:$0xff]
        %v785 = vld [vmem:[%s3 + $0x10] sm:$0xff]
        %v786 = vld [vmem:[%s3 + $0x18] sm:$0xff]
        %v787 = vld [vmem:[%s3 + $0x20] sm:$0xff]
        %v788 = vld [vmem:[%s3 + $0x28] sm:$0xff]
        %v789 = vld [vmem:[%s3 + $0x30] sm:$0xff]
        %v790 = vld [vmem:[%s3 + $0x38] sm:$0xff]
        %v791 = vld [vmem:[%s3 + $0x40] sm:$0xff]
        %v792 = vld [vmem:[%s3 + $0x48] sm:$0xff]
        %v793 = vld [vmem:[%s3 + $0x50] sm:$0xff]
        %v794 = vld [vmem:[%s3 + $0x58] sm:$0xff]
        %v795 = vld [vmem:[%s3 + $0x60] sm:$0xff]
        %v796 = vld [vmem:[%s3 + $0x68] sm:$0xff]
        %v797 = vld [vmem:[%s3 + $0x70] sm:$0xff]
        %v798 = vld [vmem:[%s3 + $0x78] sm:$0xff]
        %v799 = vld [vmem:[%s3 + $0x80] sm:$0xff]
        %v800 = vld [vmem:[%s3 + $0x88] sm:$0xff]
        %v801 = vld [vmem:[%s3 + $0x90] sm:$0xff]
        %v802 = vld [vmem:[%s3 + $0x98] sm:$0xff]
        %v803 = vld [vmem:[%s3 + $0xa0] sm:$0xff]
        %v804 = vld [vmem:[%s3 + $0xa8] sm:$0xff]
        %v805 = vld [vmem:[%s3 + $0xb0] sm:$0xff]
        %v806 = vld [vmem:[%s3 + $0xb8] sm:$0xff]
        %v807 = vld [vmem:[#allocation7] sm:$0x3]
        %v809 = vlaneseq
        %v810 = vshrl.u32 %v809, 7
        %v811 = vsub.s32 0, %v810
        %v812 = vrot.slane %v807, %v811
        %v813 = vlaneseq
        %v814 = vshrl.u32 %v813, 7
        %v815 = vsub.s32 1, %v814
        %v816 = vrot.slane %v807, %v815
        %v843 = vunpack.c.l.b16 %v783
        %v844 = vunpack.c.h.b16 %v783
        %v845 = vunpack.c.l.b16 %v784
        %v846 = vunpack.c.h.b16 %v784
        %v847 = vunpack.c.l.b16 %v785
        %v848 = vunpack.c.h.b16 %v785
        %v849 = vunpack.c.l.b16 %v786
        %v850 = vunpack.c.h.b16 %v786
        %v851 = vunpack.c.l.b16 %v787
        %v852 = vunpack.c.h.b16 %v787
        %v853 = vunpack.c.l.b16 %v788
        %v854 = vunpack.c.h.b16 %v788
        %v855 = vunpack.c.l.b16 %v789
        %v856 = vunpack.c.h.b16 %v789
        %v857 = vunpack.c.l.b16 %v790
        %v858 = vunpack.c.h.b16 %v790
        %v859 = vunpack.c.l.b16 %v791
        %v860 = vunpack.c.h.b16 %v791
        %v861 = vunpack.c.l.b16 %v792
        %v862 = vunpack.c.h.b16 %v792
        %v863 = vunpack.c.l.b16 %v793
        %v864 = vunpack.c.h.b16 %v793
        %v865 = vunpack.c.l.b16 %v794
        %v866 = vunpack.c.h.b16 %v794
        %v867 = vunpack.c.l.b16 %v795
        %v868 = vunpack.c.h.b16 %v795
        %v869 = vunpack.c.l.b16 %v796
        %v870 = vunpack.c.h.b16 %v796
        %v871 = vunpack.c.l.b16 %v797
        %v872 = vunpack.c.h.b16 %v797
        %v873 = vunpack.c.l.b16 %v798
        %v874 = vunpack.c.h.b16 %v798
        %v875 = vunpack.c.l.b16 %v799
        %v876 = vunpack.c.h.b16 %v799
        %v877 = vunpack.c.l.b16 %v800
        %v878 = vunpack.c.h.b16 %v800
        %v879 = vunpack.c.l.b16 %v801
        %v880 = vunpack.c.h.b16 %v801
        %v881 = vunpack.c.l.b16 %v802
        %v882 = vunpack.c.h.b16 %v802
        %v883 = vunpack.c.l.b16 %v803
        %v884 = vunpack.c.h.b16 %v803
        %v885 = vunpack.c.l.b16 %v804
        %v886 = vunpack.c.h.b16 %v804
        %v887 = vunpack.c.l.b16 %v805
        %v888 = vunpack.c.h.b16 %v805
        %v889 = vunpack.c.l.b16 %v806
        %v890 = vunpack.c.h.b16 %v806
        %v891 = vpack.c.b16 %v845, %v843
        %v892 = vpack.c.b16 %v846, %v844
        %v893 = vpack.c.b16 %v849, %v847
        %v894 = vpack.c.b16 %v850, %v848
        %v895 = vpack.c.b16 %v853, %v851
        %v896 = vpack.c.b16 %v854, %v852
        %v897 = vpack.c.b16 %v857, %v855
        %v898 = vpack.c.b16 %v858, %v856
        %v899 = vpack.c.b16 %v861, %v859
        %v900 = vpack.c.b16 %v862, %v860
        %v901 = vpack.c.b16 %v865, %v863
        %v902 = vpack.c.b16 %v866, %v864
        %v903 = vpack.c.b16 %v869, %v867
        %v904 = vpack.c.b16 %v870, %v868
        %v905 = vpack.c.b16 %v873, %v871
        %v906 = vpack.c.b16 %v874, %v872
        %v907 = vpack.c.b16 %v877, %v875
        %v908 = vpack.c.b16 %v878, %v876
        %v909 = vpack.c.b16 %v881, %v879
        %v910 = vpack.c.b16 %v882, %v880
        %v911 = vpack.c.b16 %v885, %v883
        %v912 = vpack.c.b16 %v886, %v884
        %v913 = vpack.c.b16 %v889, %v887
        %v914 = vpack.c.b16 %v890, %v888
        %vm939 = vcmask 523264
        %v941 = vsel %vm939, %v768, 0
        %v944 = vsel %vm939, %v770, 0
        %v947 = vsel %vm939, %v772, 0
        %v950 = vsel %vm939, %v774, 0
        %v953 = vsel %vm939, %v776, 0
        %v956 = vsel %vm939, %v778, 0
        %v959 = vsel %vm939, %v780, 0
        %v962 = vsel %vm939, %v782, 0
        %964 = vmatprep.subr.bf16.mxu0 %v892
        %965 = vmatpush1.bf16.msra.mxu0 %v891
        %966 = vmatprep.subr.bf16.mxu0 %v894
        %967 = vmatpush1.bf16.msra.mxu0 %v893
        %968 = vmatprep.subr.bf16.mxu0 %v896
        %969 = vmatpush1.bf16.msra.mxu0 %v895
        %970 = vmatprep.subr.bf16.mxu0 %v898
        %971 = vmatpush1.bf16.msra.mxu0 %v897
        %972 = vmatprep.subr.bf16.mxu0 %v900
        %973 = vmatpush1.bf16.msra.mxu0 %v899
        %974 = vmatprep.subr.bf16.mxu0 %v902
        %975 = vmatpush1.bf16.msra.mxu0 %v901
        %976 = vmatprep.subr.bf16.mxu0 %v904
        %977 = vmatpush1.bf16.msra.mxu0 %v903
        %978 = vmatprep.subr.bf16.mxu0 %v906
        %979 = vmatpush1.bf16.msra.mxu0 %v905
        %980 = vmatprep.subr.bf16.mxu0 %v908
        %981 = vmatpush1.bf16.msra.mxu0 %v907
        %982 = vmatprep.subr.bf16.mxu0 %v910
        %983 = vmatpush1.bf16.msra.mxu0 %v909
        %984 = vmatprep.subr.bf16.mxu0 %v912
        %985 = vmatpush1.bf16.msra.mxu0 %v911
        %986 = vmatprep.subr.bf16.mxu0 %v914
        %987 = vmatpush1.bf16.msra.mxu0 %v913
        %988 = vmatprep.subr.bf16.mxu0 0
        %989 = vmatpush1.bf16.msra.mxu0 0
        %990 = vmatprep.subr.bf16.mxu0 0
        %991 = vmatpush1.bf16.msra.mxu0 0
        %992 = vmatprep.subr.bf16.mxu0 0
        %993 = vmatpush1.bf16.msra.mxu0 0
        %994 = vmatprep.subr.bf16.mxu0 0
        %995 = vmatpush1.bf16.msra.mxu0 0
        %996 = vmatprep.mubr.bf16.mxu0 %v941
        %997 = vmatmul.mubr.bf16.gmra.mrb[0].mxu0 %v767
        %v998 = vpop.f32.mrb[0].mxu0
        %v999 = vadd.f32 %v812, %v998
        %v1000 = vpop.f32.mrb[0].mxu0
        %v1001 = vadd.f32 %v816, %v1000
        %v1002 = vpop.f32.mrb[0].mxu0
        %v1003 = vadd.f32 %v812, %v1002
        %v1004 = vpop.f32.mrb[0].mxu0
        %v1005 = vadd.f32 %v816, %v1004
        %1006 = vmatprep.mubr.bf16.mxu0 %v944
        %1007 = vmatmul.mubr.bf16.gmra.mrb[0].mxu0 %v769
        %v1008 = vpop.f32.mrb[0].mxu0
        %v1009 = vadd.f32 %v812, %v1008
        %v1010 = vpop.f32.mrb[0].mxu0
        %v1011 = vadd.f32 %v816, %v1010
        %v1012 = vpop.f32.mrb[0].mxu0
        %v1013 = vadd.f32 %v812, %v1012
        %v1014 = vpop.f32.mrb[0].mxu0
        %v1015 = vadd.f32 %v816, %v1014
        %1016 = vmatprep.mubr.bf16.mxu0 %v947
        %1017 = vmatmul.mubr.bf16.gmra.mrb[0].mxu0 %v771
        %v1018 = vpop.f32.mrb[0].mxu0
        %v1019 = vadd.f32 %v812, %v1018
        %v1020 = vpop.f32.mrb[0].mxu0
        %v1021 = vadd.f32 %v816, %v1020
        %v1022 = vpop.f32.mrb[0].mxu0
        %v1023 = vadd.f32 %v812, %v1022
        %v1024 = vpop.f32.mrb[0].mxu0
        %v1025 = vadd.f32 %v816, %v1024
        %1026 = vmatprep.mubr.bf16.mxu0 %v950
        %1027 = vmatmul.mubr.bf16.gmra.mrb[0].mxu0 %v773
        %v1028 = vpop.f32.mrb[0].mxu0
        %v1029 = vadd.f32 %v812, %v1028
        %v1030 = vpop.f32.mrb[0].mxu0
        %v1031 = vadd.f32 %v816, %v1030
        %v1032 = vpop.f32.mrb[0].mxu0
        %v1033 = vadd.f32 %v812, %v1032
        %v1034 = vpop.f32.mrb[0].mxu0
        %v1035 = vadd.f32 %v816, %v1034
        %1036 = vmatprep.mubr.bf16.mxu0 %v953
        %1037 = vmatmul.mubr.bf16.gmra.mrb[0].mxu0 %v775
        %v1038 = vpop.f32.mrb[0].mxu0
        %v1039 = vadd.f32 %v812, %v1038
        %v1040 = vpop.f32.mrb[0].mxu0
        %v1041 = vadd.f32 %v816, %v1040
        %v1042 = vpop.f32.mrb[0].mxu0
        %v1043 = vadd.f32 %v812, %v1042
        %v1044 = vpop.f32.mrb[0].mxu0
        %v1045 = vadd.f32 %v816, %v1044
        %1046 = vmatprep.mubr.bf16.mxu0 %v956
        %1047 = vmatmul.mubr.bf16.gmra.mrb[0].mxu0 %v777
        %v1048 = vpop.f32.mrb[0].mxu0
        %v1049 = vadd.f32 %v812, %v1048
        %v1050 = vpop.f32.mrb[0].mxu0
        %v1051 = vadd.f32 %v816, %v1050
        %v1052 = vpop.f32.mrb[0].mxu0
        %v1053 = vadd.f32 %v812, %v1052
        %v1054 = vpop.f32.mrb[0].mxu0
        %v1055 = vadd.f32 %v816, %v1054
        %1056 = vmatprep.mubr.bf16.mxu0 %v959
        %1057 = vmatmul.mubr.bf16.gmra.mrb[0].mxu0 %v779
        %v1058 = vpop.f32.mrb[0].mxu0
        %v1059 = vadd.f32 %v812, %v1058
        %v1060 = vpop.f32.mrb[0].mxu0
        %v1061 = vadd.f32 %v816, %v1060
        %v1062 = vpop.f32.mrb[0].mxu0
        %v1063 = vadd.f32 %v812, %v1062
        %v1064 = vpop.f32.mrb[0].mxu0
        %v1065 = vadd.f32 %v816, %v1064
        %1066 = vmatprep.mubr.bf16.mxu0 %v962
        %1067 = vmatmul.mubr.bf16.gmra.mrb[0].mxu0 %v781
        %v1068 = vpop.f32.mrb[0].mxu0
        %v1069 = vadd.f32 %v812, %v1068
        %v1070 = vpop.f32.mrb[0].mxu0
        %v1071 = vadd.f32 %v816, %v1070
        %v1072 = vpop.f32.mrb[0].mxu0
        %v1073 = vadd.f32 %v812, %v1072
        %v1074 = vpop.f32.mrb[0].mxu0
        %v1075 = vadd.f32 %v816, %v1074
        %1076 = vdwg.mxu0
        %v1077 = vmax.f32 %v999, 0.0
        %v1078 = vmax.f32 %v1001, 0.0
        %v1079 = vmax.f32 %v1003, 0.0
        %v1080 = vmax.f32 %v1005, 0.0
        %v1081 = vmax.f32 %v1009, 0.0
        %v1082 = vmax.f32 %v1011, 0.0
        %v1083 = vmax.f32 %v1013, 0.0
        %v1084 = vmax.f32 %v1015, 0.0
        %v1085 = vmax.f32 %v1019, 0.0
        %v1086 = vmax.f32 %v1021, 0.0
        %v1087 = vmax.f32 %v1023, 0.0
        %v1088 = vmax.f32 %v1025, 0.0
        %v1089 = vmax.f32 %v1029, 0.0
        %v1090 = vmax.f32 %v1031, 0.0
        %v1091 = vmax.f32 %v1033, 0.0
        %v1092 = vmax.f32 %v1035, 0.0
        %v1093 = vmax.f32 %v1039, 0.0
        %v1094 = vmax.f32 %v1041, 0.0
        %v1095 = vmax.f32 %v1043, 0.0
        %v1096 = vmax.f32 %v1045, 0.0
        %v1097 = vmax.f32 %v1049, 0.0
        %v1098 = vmax.f32 %v1051, 0.0
        %v1099 = vmax.f32 %v1053, 0.0
        %v1100 = vmax.f32 %v1055, 0.0
        %v1101 = vmax.f32 %v1059, 0.0
        %v1102 = vmax.f32 %v1061, 0.0
        %v1103 = vmax.f32 %v1063, 0.0
        %v1104 = vmax.f32 %v1065, 0.0
        %v1105 = vmax.f32 %v1069, 0.0
        %v1106 = vmax.f32 %v1071, 0.0
        %v1107 = vmax.f32 %v1073, 0.0
        %v1108 = vmax.f32 %v1075, 0.0
        %v1109 = vpack.c.bf16 %v1079, %v1077
        %v1110 = vpack.c.bf16 %v1080, %v1078
        %v1111 = vpack.c.bf16 %v1083, %v1081
        %v1112 = vpack.c.bf16 %v1084, %v1082
        %v1113 = vpack.c.bf16 %v1087, %v1085
        %v1114 = vpack.c.bf16 %v1088, %v1086
        %v1115 = vpack.c.bf16 %v1091, %v1089
        %v1116 = vpack.c.bf16 %v1092, %v1090
        %v1117 = vpack.c.bf16 %v1095, %v1093
        %v1118 = vpack.c.bf16 %v1096, %v1094
        %v1119 = vpack.c.bf16 %v1099, %v1097
        %v1120 = vpack.c.bf16 %v1100, %v1098
        %v1121 = vpack.c.bf16 %v1103, %v1101
        %v1122 = vpack.c.bf16 %v1104, %v1102
        %v1123 = vpack.c.bf16 %v1107, %v1105
        %v1124 = vpack.c.bf16 %v1108, %v1106
        %v1125 = vld [vmem:[#allocation8] sm:$0xff]
        %v1126 = vld [vmem:[#allocation8 + $0x8] sm:$0xff]
        %v1127 = vld [vmem:[#allocation8 + $0x10] sm:$0xff]
        %v1128 = vld [vmem:[#allocation8 + $0x18] sm:$0xff]
        %v1129 = vld [vmem:[#allocation8 + $0x20] sm:$0xff]
        %v1130 = vld [vmem:[#allocation8 + $0x28] sm:$0xff]
        %v1131 = vld [vmem:[#allocation8 + $0x30] sm:$0xff]
        %v1132 = vld [vmem:[#allocation8 + $0x38] sm:$0xff]
        %v1133 = vld [vmem:[#allocation8 + $0x40] sm:$0xff]
        %v1134 = vld [vmem:[#allocation8 + $0x48] sm:$0xff]
        %v1135 = vld [vmem:[#allocation8 + $0x50] sm:$0xff]
        %v1136 = vld [vmem:[#allocation8 + $0x58] sm:$0xff]
        %v1137 = vld [vmem:[#allocation8 + $0x60] sm:$0xff]
        %v1138 = vld [vmem:[#allocation8 + $0x68] sm:$0xff]
        %v1139 = vld [vmem:[#allocation8 + $0x70] sm:$0xff]
        %v1140 = vld [vmem:[#allocation8 + $0x78] sm:$0xff]
        %v1141 = vld [vmem:[#allocation8 + $0x80] sm:$0xff]
        %v1142 = vld [vmem:[#allocation8 + $0x88] sm:$0xff]
        %v1143 = vld [vmem:[#allocation8 + $0x90] sm:$0xff]
        %v1144 = vld [vmem:[#allocation8 + $0x98] sm:$0xff]
        %v1145 = vld [vmem:[#allocation8 + $0xa0] sm:$0xff]
        %v1146 = vld [vmem:[#allocation8 + $0xa8] sm:$0xff]
        %v1147 = vld [vmem:[#allocation8 + $0xb0] sm:$0xff]
        %v1148 = vld [vmem:[#allocation8 + $0xb8] sm:$0xff]
        %v1149 = vld [vmem:[#allocation8 + $0xc0] sm:$0xff]
        %v1150 = vld [vmem:[#allocation8 + $0xc8] sm:$0xff]
        %v1151 = vld [vmem:[#allocation8 + $0xd0] sm:$0xff]
        %v1152 = vld [vmem:[#allocation8 + $0xd8] sm:$0xff]
        %v1153 = vld [vmem:[#allocation8 + $0xe0] sm:$0xff]
        %v1154 = vld [vmem:[#allocation8 + $0xe8] sm:$0xff]
        %v1155 = vld [vmem:[#allocation8 + $0xf0] sm:$0xff]
        %v1156 = vld [vmem:[#allocation8 + $0xf8] sm:$0xff]
        %v1157 = vld [vmem:[#allocation8 + $0x100] sm:$0xff]
        %v1158 = vld [vmem:[#allocation8 + $0x108] sm:$0xff]
        %v1159 = vld [vmem:[#allocation8 + $0x110] sm:$0xff]
        %v1160 = vld [vmem:[#allocation8 + $0x118] sm:$0xff]
        %v1161 = vld [vmem:[#allocation8 + $0x120] sm:$0xff]
        %v1162 = vld [vmem:[#allocation8 + $0x128] sm:$0xff]
        %v1163 = vld [vmem:[#allocation8 + $0x130] sm:$0xff]
        %v1164 = vld [vmem:[#allocation8 + $0x138] sm:$0xff]
        %v1165 = vld [vmem:[#allocation8 + $0x140] sm:$0xff]
        %v1166 = vld [vmem:[#allocation8 + $0x148] sm:$0xff]
        %v1167 = vld [vmem:[#allocation8 + $0x150] sm:$0xff]
        %v1168 = vld [vmem:[#allocation8 + $0x158] sm:$0xff]
        %v1169 = vld [vmem:[#allocation8 + $0x160] sm:$0xff]
        %v1170 = vld [vmem:[#allocation8 + $0x168] sm:$0xff]
        %v1171 = vld [vmem:[#allocation8 + $0x170] sm:$0xff]
        %v1172 = vld [vmem:[#allocation8 + $0x178] sm:$0xff]
        %v1173 = vld [vmem:[%s6] sm:$0xf]
        %v1175 = vlaneseq
        %v1176 = vshrl.u32 %v1175, 7
        %v1177 = vsub.s32 0, %v1176
        %v1178 = vrot.slane %v1173, %v1177
        %v1179 = vlaneseq
        %v1180 = vshrl.u32 %v1179, 7
        %v1181 = vsub.s32 1, %v1180
        %v1182 = vrot.slane %v1173, %v1181
        %v1183 = vlaneseq
        %v1184 = vshrl.u32 %v1183, 7
        %v1185 = vsub.s32 2, %v1184
        %v1186 = vrot.slane %v1173, %v1185
        %v1187 = vlaneseq
        %v1188 = vshrl.u32 %v1187, 7
        %v1189 = vsub.s32 3, %v1188
        %v1190 = vrot.slane %v1173, %v1189
        %v1243 = vunpack.c.l.b16 %v1125
        %v1244 = vunpack.c.h.b16 %v1125
        %v1245 = vunpack.c.l.b16 %v1126
        %v1246 = vunpack.c.h.b16 %v1126
        %v1247 = vunpack.c.l.b16 %v1127
        %v1248 = vunpack.c.h.b16 %v1127
        %v1249 = vunpack.c.l.b16 %v1128
        %v1250 = vunpack.c.h.b16 %v1128
        %v1251 = vunpack.c.l.b16 %v1129
        %v1252 = vunpack.c.h.b16 %v1129
        %v1253 = vunpack.c.l.b16 %v1130
        %v1254 = vunpack.c.h.b16 %v1130
        %v1255 = vunpack.c.l.b16 %v1131
        %v1256 = vunpack.c.h.b16 %v1131
        %v1257 = vunpack.c.l.b16 %v1132
        %v1258 = vunpack.c.h.b16 %v1132
        %v1259 = vunpack.c.l.b16 %v1133
        %v1260 = vunpack.c.h.b16 %v1133
        %v1261 = vunpack.c.l.b16 %v1134
        %v1262 = vunpack.c.h.b16 %v1134
        %v1263 = vunpack.c.l.b16 %v1135
        %v1264 = vunpack.c.h.b16 %v1135
        %v1265 = vunpack.c.l.b16 %v1136
        %v1266 = vunpack.c.h.b16 %v1136
        %v1267 = vunpack.c.l.b16 %v1137
        %v1268 = vunpack.c.h.b16 %v1137
        %v1269 = vunpack.c.l.b16 %v1138
        %v1270 = vunpack.c.h.b16 %v1138
        %v1271 = vunpack.c.l.b16 %v1139
        %v1272 = vunpack.c.h.b16 %v1139
        %v1273 = vunpack.c.l.b16 %v1140
        %v1274 = vunpack.c.h.b16 %v1140
        %v1275 = vunpack.c.l.b16 %v1141
        %v1276 = vunpack.c.h.b16 %v1141
        %v1277 = vunpack.c.l.b16 %v1142
        %v1278 = vunpack.c.h.b16 %v1142
        %v1279 = vunpack.c.l.b16 %v1143
        %v1280 = vunpack.c.h.b16 %v1143
        %v1281 = vunpack.c.l.b16 %v1144
        %v1282 = vunpack.c.h.b16 %v1144
        %v1283 = vunpack.c.l.b16 %v1145
        %v1284 = vunpack.c.h.b16 %v1145
        %v1285 = vunpack.c.l.b16 %v1146
        %v1286 = vunpack.c.h.b16 %v1146
        %v1287 = vunpack.c.l.b16 %v1147
        %v1288 = vunpack.c.h.b16 %v1147
        %v1289 = vunpack.c.l.b16 %v1148
        %v1290 = vunpack.c.h.b16 %v1148
        %v1291 = vunpack.c.l.b16 %v1149
        %v1292 = vunpack.c.h.b16 %v1149
        %v1293 = vunpack.c.l.b16 %v1150
        %v1294 = vunpack.c.h.b16 %v1150
        %v1295 = vunpack.c.l.b16 %v1151
        %v1296 = vunpack.c.h.b16 %v1151
        %v1297 = vunpack.c.l.b16 %v1152
        %v1298 = vunpack.c.h.b16 %v1152
        %v1299 = vunpack.c.l.b16 %v1153
        %v1300 = vunpack.c.h.b16 %v1153
        %v1301 = vunpack.c.l.b16 %v1154
        %v1302 = vunpack.c.h.b16 %v1154
        %v1303 = vunpack.c.l.b16 %v1155
        %v1304 = vunpack.c.h.b16 %v1155
        %v1305 = vunpack.c.l.b16 %v1156
        %v1306 = vunpack.c.h.b16 %v1156
        %v1307 = vunpack.c.l.b16 %v1157
        %v1308 = vunpack.c.h.b16 %v1157
        %v1309 = vunpack.c.l.b16 %v1158
        %v1310 = vunpack.c.h.b16 %v1158
        %v1311 = vunpack.c.l.b16 %v1159
        %v1312 = vunpack.c.h.b16 %v1159
        %v1313 = vunpack.c.l.b16 %v1160
        %v1314 = vunpack.c.h.b16 %v1160
        %v1315 = vunpack.c.l.b16 %v1161
        %v1316 = vunpack.c.h.b16 %v1161
        %v1317 = vunpack.c.l.b16 %v1162
        %v1318 = vunpack.c.h.b16 %v1162
        %v1319 = vunpack.c.l.b16 %v1163
        %v1320 = vunpack.c.h.b16 %v1163
        %v1321 = vunpack.c.l.b16 %v1164
        %v1322 = vunpack.c.h.b16 %v1164
        %v1323 = vunpack.c.l.b16 %v1165
        %v1324 = vunpack.c.h.b16 %v1165
        %v1325 = vunpack.c.l.b16 %v1166
        %v1326 = vunpack.c.h.b16 %v1166
        %v1327 = vunpack.c.l.b16 %v1167
        %v1328 = vunpack.c.h.b16 %v1167
        %v1329 = vunpack.c.l.b16 %v1168
        %v1330 = vunpack.c.h.b16 %v1168
        %v1331 = vunpack.c.l.b16 %v1169
        %v1332 = vunpack.c.h.b16 %v1169
        %v1333 = vunpack.c.l.b16 %v1170
        %v1334 = vunpack.c.h.b16 %v1170
        %v1335 = vunpack.c.l.b16 %v1171
        %v1336 = vunpack.c.h.b16 %v1171
        %v1337 = vunpack.c.l.b16 %v1172
        %v1338 = vunpack.c.h.b16 %v1172
        %v1339 = vpack.c.b16 %v1247, %v1243
        %v1340 = vpack.c.b16 %v1248, %v1244
        %v1341 = vpack.c.b16 %v1249, %v1245
        %v1342 = vpack.c.b16 %v1250, %v1246
        %v1343 = vpack.c.b16 %v1255, %v1251
        %v1344 = vpack.c.b16 %v1256, %v1252
        %v1345 = vpack.c.b16 %v1257, %v1253
        %v1346 = vpack.c.b16 %v1258, %v1254
        %v1347 = vpack.c.b16 %v1263, %v1259
        %v1348 = vpack.c.b16 %v1264, %v1260
        %v1349 = vpack.c.b16 %v1265, %v1261
        %v1350 = vpack.c.b16 %v1266, %v1262
        %v1351 = vpack.c.b16 %v1271, %v1267
        %v1352 = vpack.c.b16 %v1272, %v1268
        %v1353 = vpack.c.b16 %v1273, %v1269
        %v1354 = vpack.c.b16 %v1274, %v1270
        %v1355 = vpack.c.b16 %v1279, %v1275
        %v1356 = vpack.c.b16 %v1280, %v1276
        %v1357 = vpack.c.b16 %v1281, %v1277
        %v1358 = vpack.c.b16 %v1282, %v1278
        %v1359 = vpack.c.b16 %v1287, %v1283
        %v1360 = vpack.c.b16 %v1288, %v1284
        %v1361 = vpack.c.b16 %v1289, %v1285
        %v1362 = vpack.c.b16 %v1290, %v1286
        %v1363 = vpack.c.b16 %v1295, %v1291
        %v1364 = vpack.c.b16 %v1296, %v1292
        %v1365 = vpack.c.b16 %v1297, %v1293
        %v1366 = vpack.c.b16 %v1298, %v1294
        %v1367 = vpack.c.b16 %v1303, %v1299
        %v1368 = vpack.c.b16 %v1304, %v1300
        %v1369 = vpack.c.b16 %v1305, %v1301
        %v1370 = vpack.c.b16 %v1306, %v1302
        %v1371 = vpack.c.b16 %v1311, %v1307
        %v1372 = vpack.c.b16 %v1312, %v1308
        %v1373 = vpack.c.b16 %v1313, %v1309
        %v1374 = vpack.c.b16 %v1314, %v1310
        %v1375 = vpack.c.b16 %v1319, %v1315
        %v1376 = vpack.c.b16 %v1320, %v1316
        %v1377 = vpack.c.b16 %v1321, %v1317
        %v1378 = vpack.c.b16 %v1322, %v1318
        %v1379 = vpack.c.b16 %v1327, %v1323
        %v1380 = vpack.c.b16 %v1328, %v1324
        %v1381 = vpack.c.b16 %v1329, %v1325
        %v1382 = vpack.c.b16 %v1330, %v1326
        %v1383 = vpack.c.b16 %v1335, %v1331
        %v1384 = vpack.c.b16 %v1336, %v1332
        %v1385 = vpack.c.b16 %v1337, %v1333
        %v1386 = vpack.c.b16 %v1338, %v1334
        %v1436 = vsel %vm939, %v1110, 0
        %v1439 = vsel %vm939, %v1112, 0
        %v1442 = vsel %vm939, %v1114, 0
        %v1445 = vsel %vm939, %v1116, 0
        %v1448 = vsel %vm939, %v1118, 0
        %v1451 = vsel %vm939, %v1120, 0
        %v1454 = vsel %vm939, %v1122, 0
        %v1457 = vsel %vm939, %v1124, 0
        %1459 = vmatprep.subr.bf16.mxu0 %v1340
        %1460 = vmatpush1.bf16.msra.mxu0 %v1339
        %1461 = vmatprep.subr.bf16.mxu0 %v1344
        %1462 = vmatpush1.bf16.msra.mxu0 %v1343
        %1463 = vmatprep.subr.bf16.mxu0 %v1348
        %1464 = vmatpush1.bf16.msra.mxu0 %v1347
        %1465 = vmatprep.subr.bf16.mxu0 %v1352
        %1466 = vmatpush1.bf16.msra.mxu0 %v1351
        %1467 = vmatprep.subr.bf16.mxu0 %v1356
        %1468 = vmatpush1.bf16.msra.mxu0 %v1355
        %1469 = vmatprep.subr.bf16.mxu0 %v1360
        %1470 = vmatpush1.bf16.msra.mxu0 %v1359
        %1471 = vmatprep.subr.bf16.mxu0 %v1364
        %1472 = vmatpush1.bf16.msra.mxu0 %v1363
        %1473 = vmatprep.subr.bf16.mxu0 %v1368
        %1474 = vmatpush1.bf16.msra.mxu0 %v1367
        %1475 = vmatprep.subr.bf16.mxu0 %v1372
        %1476 = vmatpush1.bf16.msra.mxu0 %v1371
        %1477 = vmatprep.subr.bf16.mxu0 %v1376
        %1478 = vmatpush1.bf16.msra.mxu0 %v1375
        %1479 = vmatprep.subr.bf16.mxu0 %v1380
        %1480 = vmatpush1.bf16.msra.mxu0 %v1379
        %1481 = vmatprep.subr.bf16.mxu0 %v1384
        %1482 = vmatpush1.bf16.msra.mxu0 %v1383
        %1483 = vmatprep.subr.bf16.mxu0 0
        %1484 = vmatpush1.bf16.msra.mxu0 0
        %1485 = vmatprep.subr.bf16.mxu0 0
        %1486 = vmatpush1.bf16.msra.mxu0 0
        %1487 = vmatprep.subr.bf16.mxu0 0
        %1488 = vmatpush1.bf16.msra.mxu0 0
        %1489 = vmatprep.subr.bf16.mxu0 0
        %1490 = vmatpush1.bf16.msra.mxu0 0
        %1491 = vmatprep.mubr.bf16.mxu0 %v1436
        %1492 = vmatmul.mubr.bf16.gmra.mrb[0].mxu0 %v1109
        %v1493 = vpop.f32.mrb[0].mxu0
        %v1494 = vadd.f32 %v1178, %v1493
        %v1495 = vpop.f32.mrb[0].mxu0
        %v1496 = vadd.f32 %v1182, %v1495
        %v1497 = vpop.f32.mrb[0].mxu0
        %v1498 = vadd.f32 %v1178, %v1497
        %v1499 = vpop.f32.mrb[0].mxu0
        %v1500 = vadd.f32 %v1182, %v1499
        %1501 = vmatprep.mubr.bf16.mxu0 %v1439
        %1502 = vmatmul.mubr.bf16.gmra.mrb[0].mxu0 %v1111
        %v1503 = vpop.f32.mrb[0].mxu0
        %v1504 = vadd.f32 %v1178, %v1503
        %v1505 = vpop.f32.mrb[0].mxu0
        %v1506 = vadd.f32 %v1182, %v1505
        %v1507 = vpop.f32.mrb[0].mxu0
        %v1508 = vadd.f32 %v1178, %v1507
        %v1509 = vpop.f32.mrb[0].mxu0
        %v1510 = vadd.f32 %v1182, %v1509
        %1511 = vmatprep.mubr.bf16.mxu0 %v1442
        %1512 = vmatmul.mubr.bf16.gmra.mrb[0].mxu0 %v1113
        %v1513 = vpop.f32.mrb[0].mxu0
        %v1514 = vadd.f32 %v1178, %v1513
        %v1515 = vpop.f32.mrb[0].mxu0
        %v1516 = vadd.f32 %v1182, %v1515
        %v1517 = vpop.f32.mrb[0].mxu0
        %v1518 = vadd.f32 %v1178, %v1517
        %v1519 = vpop.f32.mrb[0].mxu0
        %v1520 = vadd.f32 %v1182, %v1519
        %1521 = vmatprep.mubr.bf16.mxu0 %v1445
        %1522 = vmatmul.mubr.bf16.gmra.mrb[0].mxu0 %v1115
        %v1523 = vpop.f32.mrb[0].mxu0
        %v1524 = vadd.f32 %v1178, %v1523
        %v1525 = vpop.f32.mrb[0].mxu0
        %v1526 = vadd.f32 %v1182, %v1525
        %v1527 = vpop.f32.mrb[0].mxu0
        %v1528 = vadd.f32 %v1178, %v1527
        %v1529 = vpop.f32.mrb[0].mxu0
        %v1530 = vadd.f32 %v1182, %v1529
        %1531 = vmatprep.mubr.bf16.mxu0 %v1448
        %1532 = vmatmul.mubr.bf16.gmra.mrb[0].mxu0 %v1117
        %v1533 = vpop.f32.mrb[0].mxu0
        %v1534 = vadd.f32 %v1178, %v1533
        %v1535 = vpop.f32.mrb[0].mxu0
        %v1536 = vadd.f32 %v1182, %v1535
        %v1537 = vpop.f32.mrb[0].mxu0
        %v1538 = vadd.f32 %v1178, %v1537
        %v1539 = vpop.f32.mrb[0].mxu0
        %v1540 = vadd.f32 %v1182, %v1539
        %1541 = vmatprep.mubr.bf16.mxu0 %v1451
        %1542 = vmatmul.mubr.bf16.gmra.mrb[0].mxu0 %v1119
        %v1543 = vpop.f32.mrb[0].mxu0
        %v1544 = vadd.f32 %v1178, %v1543
        %v1545 = vpop.f32.mrb[0].mxu0
        %v1546 = vadd.f32 %v1182, %v1545
        %v1547 = vpop.f32.mrb[0].mxu0
        %v1548 = vadd.f32 %v1178, %v1547
        %v1549 = vpop.f32.mrb[0].mxu0
        %v1550 = vadd.f32 %v1182, %v1549
        %1551 = vmatprep.mubr.bf16.mxu0 %v1454
        %1552 = vmatmul.mubr.bf16.gmra.mrb[0].mxu0 %v1121
        %v1553 = vpop.f32.mrb[0].mxu0
        %v1554 = vadd.f32 %v1178, %v1553
        %v1555 = vpop.f32.mrb[0].mxu0
        %v1556 = vadd.f32 %v1182, %v1555
        %v1557 = vpop.f32.mrb[0].mxu0
        %v1558 = vadd.f32 %v1178, %v1557
        %v1559 = vpop.f32.mrb[0].mxu0
        %v1560 = vadd.f32 %v1182, %v1559
        %1561 = vmatprep.mubr.bf16.mxu0 %v1457
        %1562 = vmatmul.mubr.bf16.gmra.mrb[0].mxu0 %v1123
        %v1563 = vpop.f32.mrb[0].mxu0
        %v1564 = vadd.f32 %v1178, %v1563
        %v1565 = vpop.f32.mrb[0].mxu0
        %v1566 = vadd.f32 %v1182, %v1565
        %v1567 = vpop.f32.mrb[0].mxu0
        %v1568 = vadd.f32 %v1178, %v1567
        %v1569 = vpop.f32.mrb[0].mxu0
        %v1570 = vadd.f32 %v1182, %v1569
        %1571 = vdwg.mxu0
        %1572 = vmatprep.subr.bf16.mxu0 %v1342
        %1573 = vmatpush1.bf16.msra.mxu0 %v1341
        %1574 = vmatprep.subr.bf16.mxu0 %v1346
        %1575 = vmatpush1.bf16.msra.mxu0 %v1345
        %1576 = vmatprep.subr.bf16.mxu0 %v1350
        %1577 = vmatpush1.bf16.msra.mxu0 %v1349
        %1578 = vmatprep.subr.bf16.mxu0 %v1354
        %1579 = vmatpush1.bf16.msra.mxu0 %v1353
        %1580 = vmatprep.subr.bf16.mxu0 %v1358
        %1581 = vmatpush1.bf16.msra.mxu0 %v1357
        %1582 = vmatprep.subr.bf16.mxu0 %v1362
        %1583 = vmatpush1.bf16.msra.mxu0 %v1361
        %1584 = vmatprep.subr.bf16.mxu0 %v1366
        %1585 = vmatpush1.bf16.msra.mxu0 %v1365
        %1586 = vmatprep.subr.bf16.mxu0 %v1370
        %1587 = vmatpush1.bf16.msra.mxu0 %v1369
        %1588 = vmatprep.subr.bf16.mxu0 %v1374
        %1589 = vmatpush1.bf16.msra.mxu0 %v1373
        %1590 = vmatprep.subr.bf16.mxu0 %v1378
        %1591 = vmatpush1.bf16.msra.mxu0 %v1377
        %1592 = vmatprep.subr.bf16.mxu0 %v1382
        %1593 = vmatpush1.bf16.msra.mxu0 %v1381
        %1594 = vmatprep.subr.bf16.mxu0 %v1386
        %1595 = vmatpush1.bf16.msra.mxu0 %v1385
        %1596 = vmatprep.subr.bf16.mxu0 0
        %1597 = vmatpush1.bf16.msra.mxu0 0
        %1598 = vmatprep.subr.bf16.mxu0 0
        %1599 = vmatpush1.bf16.msra.mxu0 0
        %1600 = vmatprep.subr.bf16.mxu0 0
        %1601 = vmatpush1.bf16.msra.mxu0 0
        %1602 = vmatprep.subr.bf16.mxu0 0
        %1603 = vmatpush1.bf16.msra.mxu0 0
        %1604 = vmatprep.mubr.bf16.mxu0 %v1436
        %1605 = vmatmul.mubr.bf16.gmra.mrb[0].mxu0 %v1109
        %v1606 = vpop.f32.mrb[0].mxu0
        %v1607 = vadd.f32 %v1186, %v1606
        %v1608 = vpop.f32.mrb[0].mxu0
        %v1609 = vadd.f32 %v1190, %v1608
        %v1610 = vpop.f32.mrb[0].mxu0
        %v1611 = vadd.f32 %v1186, %v1610
        %v1612 = vpop.f32.mrb[0].mxu0
        %v1613 = vadd.f32 %v1190, %v1612
        %1614 = vmatprep.mubr.bf16.mxu0 %v1439
        %1615 = vmatmul.mubr.bf16.gmra.mrb[0].mxu0 %v1111
        %v1616 = vpop.f32.mrb[0].mxu0
        %v1617 = vadd.f32 %v1186, %v1616
        %v1618 = vpop.f32.mrb[0].mxu0
        %v1619 = vadd.f32 %v1190, %v1618
        %v1620 = vpop.f32.mrb[0].mxu0
        %v1621 = vadd.f32 %v1186, %v1620
        %v1622 = vpop.f32.mrb[0].mxu0
        %v1623 = vadd.f32 %v1190, %v1622
        %1624 = vmatprep.mubr.bf16.mxu0 %v1442
        %1625 = vmatmul.mubr.bf16.gmra.mrb[0].mxu0 %v1113
        %v1626 = vpop.f32.mrb[0].mxu0
        %v1627 = vadd.f32 %v1186, %v1626
        %v1628 = vpop.f32.mrb[0].mxu0
        %v1629 = vadd.f32 %v1190, %v1628
        %v1630 = vpop.f32.mrb[0].mxu0
        %v1631 = vadd.f32 %v1186, %v1630
        %v1632 = vpop.f32.mrb[0].mxu0
        %v1633 = vadd.f32 %v1190, %v1632
        %1634 = vmatprep.mubr.bf16.mxu0 %v1445
        %1635 = vmatmul.mubr.bf16.gmra.mrb[0].mxu0 %v1115
        %v1636 = vpop.f32.mrb[0].mxu0
        %v1637 = vadd.f32 %v1186, %v1636
        %v1638 = vpop.f32.mrb[0].mxu0
        %v1639 = vadd.f32 %v1190, %v1638
        %v1640 = vpop.f32.mrb[0].mxu0
        %v1641 = vadd.f32 %v1186, %v1640
        %v1642 = vpop.f32.mrb[0].mxu0
        %v1643 = vadd.f32 %v1190, %v1642
        %1644 = vmatprep.mubr.bf16.mxu0 %v1448
        %1645 = vmatmul.mubr.bf16.gmra.mrb[0].mxu0 %v1117
        %v1646 = vpop.f32.mrb[0].mxu0
        %v1647 = vadd.f32 %v1186, %v1646
        %v1648 = vpop.f32.mrb[0].mxu0
        %v1649 = vadd.f32 %v1190, %v1648
        %v1650 = vpop.f32.mrb[0].mxu0
        %v1651 = vadd.f32 %v1186, %v1650
        %v1652 = vpop.f32.mrb[0].mxu0
        %v1653 = vadd.f32 %v1190, %v1652
        %1654 = vmatprep.mubr.bf16.mxu0 %v1451
        %1655 = vmatmul.mubr.bf16.gmra.mrb[0].mxu0 %v1119
        %v1656 = vpop.f32.mrb[0].mxu0
        %v1657 = vadd.f32 %v1186, %v1656
        %v1658 = vpop.f32.mrb[0].mxu0
        %v1659 = vadd.f32 %v1190, %v1658
        %v1660 = vpop.f32.mrb[0].mxu0
        %v1661 = vadd.f32 %v1186, %v1660
        %v1662 = vpop.f32.mrb[0].mxu0
        %v1663 = vadd.f32 %v1190, %v1662
        %1664 = vmatprep.mubr.bf16.mxu0 %v1454
        %1665 = vmatmul.mubr.bf16.gmra.mrb[0].mxu0 %v1121
        %v1666 = vpop.f32.mrb[0].mxu0
        %v1667 = vadd.f32 %v1186, %v1666
        %v1668 = vpop.f32.mrb[0].mxu0
        %v1669 = vadd.f32 %v1190, %v1668
        %v1670 = vpop.f32.mrb[0].mxu0
        %v1671 = vadd.f32 %v1186, %v1670
        %v1672 = vpop.f32.mrb[0].mxu0
        %v1673 = vadd.f32 %v1190, %v1672
        %1674 = vmatprep.mubr.bf16.mxu0 %v1457
        %1675 = vmatmul.mubr.bf16.gmra.mrb[0].mxu0 %v1123
        %v1676 = vpop.f32.mrb[0].mxu0
        %v1677 = vadd.f32 %v1186, %v1676
        %v1678 = vpop.f32.mrb[0].mxu0
        %v1679 = vadd.f32 %v1190, %v1678
        %v1680 = vpop.f32.mrb[0].mxu0
        %v1681 = vadd.f32 %v1186, %v1680
        %v1682 = vpop.f32.mrb[0].mxu0
        %v1683 = vadd.f32 %v1190, %v1682
        %1684 = vdwg.mxu0
        %v1685 = vmax.f32 %v1494, 0.0
        %v1686 = vmax.f32 %v1496, 0.0
        %v1687 = vmax.f32 %v1607, 0.0
        %v1688 = vmax.f32 %v1609, 0.0
        %v1689 = vmax.f32 %v1498, 0.0
        %v1690 = vmax.f32 %v1500, 0.0
        %v1691 = vmax.f32 %v1611, 0.0
        %v1692 = vmax.f32 %v1613, 0.0
        %v1693 = vmax.f32 %v1504, 0.0
        %v1694 = vmax.f32 %v1506, 0.0
        %v1695 = vmax.f32 %v1617, 0.0
        %v1696 = vmax.f32 %v1619, 0.0
        %v1697 = vmax.f32 %v1508, 0.0
        %v1698 = vmax.f32 %v1510, 0.0
        %v1699 = vmax.f32 %v1621, 0.0
        %v1700 = vmax.f32 %v1623, 0.0
        %v1701 = vmax.f32 %v1514, 0.0
        %v1702 = vmax.f32 %v1516, 0.0
        %v1703 = vmax.f32 %v1627, 0.0
        %v1704 = vmax.f32 %v1629, 0.0
        %v1705 = vmax.f32 %v1518, 0.0
        %v1706 = vmax.f32 %v1520, 0.0
        %v1707 = vmax.f32 %v1631, 0.0
        %v1708 = vmax.f32 %v1633, 0.0
        %v1709 = vmax.f32 %v1524, 0.0
        %v1710 = vmax.f32 %v1526, 0.0
        %v1711 = vmax.f32 %v1637, 0.0
        %v1712 = vmax.f32 %v1639, 0.0
        %v1713 = vmax.f32 %v1528, 0.0
        %v1714 = vmax.f32 %v1530, 0.0
        %v1715 = vmax.f32 %v1641, 0.0
        %v1716 = vmax.f32 %v1643, 0.0
        %v1717 = vmax.f32 %v1534, 0.0
        %v1718 = vmax.f32 %v1536, 0.0
        %v1719 = vmax.f32 %v1647, 0.0
        %v1720 = vmax.f32 %v1649, 0.0
        %v1721 = vmax.f32 %v1538, 0.0
        %v1722 = vmax.f32 %v1540, 0.0
        %v1723 = vmax.f32 %v1651, 0.0
        %v1724 = vmax.f32 %v1653, 0.0
        %v1725 = vmax.f32 %v1544, 0.0
        %v1726 = vmax.f32 %v1546, 0.0
        %v1727 = vmax.f32 %v1657, 0.0
        %v1728 = vmax.f32 %v1659, 0.0
        %v1729 = vmax.f32 %v1548, 0.0
        %v1730 = vmax.f32 %v1550, 0.0
        %v1731 = vmax.f32 %v1661, 0.0
        %v1732 = vmax.f32 %v1663, 0.0
        %v1733 = vmax.f32 %v1554, 0.0
        %v1734 = vmax.f32 %v1556, 0.0
        %v1735 = vmax.f32 %v1667, 0.0
        %v1736 = vmax.f32 %v1669, 0.0
        %v1737 = vmax.f32 %v1558, 0.0
        %v1738 = vmax.f32 %v1560, 0.0
        %v1739 = vmax.f32 %v1671, 0.0
        %v1740 = vmax.f32 %v1673, 0.0
        %v1741 = vmax.f32 %v1564, 0.0
        %v1742 = vmax.f32 %v1566, 0.0
        %v1743 = vmax.f32 %v1677, 0.0
        %v1744 = vmax.f32 %v1679, 0.0
        %v1745 = vmax.f32 %v1568, 0.0
        %v1746 = vmax.f32 %v1570, 0.0
        %v1747 = vmax.f32 %v1681, 0.0
        %v1748 = vmax.f32 %v1683, 0.0
        %v1749 = vpack.c.bf16 %v1689, %v1685
        %v1750 = vpack.c.bf16 %v1690, %v1686
        %v1751 = vpack.c.bf16 %v1691, %v1687
        %v1752 = vpack.c.bf16 %v1692, %v1688
        %v1753 = vpack.c.bf16 %v1697, %v1693
        %v1754 = vpack.c.bf16 %v1698, %v1694
        %v1755 = vpack.c.bf16 %v1699, %v1695
        %v1756 = vpack.c.bf16 %v1700, %v1696
        %v1757 = vpack.c.bf16 %v1705, %v1701
        %v1758 = vpack.c.bf16 %v1706, %v1702
        %v1759 = vpack.c.bf16 %v1707, %v1703
        %v1760 = vpack.c.bf16 %v1708, %v1704
        %v1761 = vpack.c.bf16 %v1713, %v1709
        %v1762 = vpack.c.bf16 %v1714, %v1710
        %v1763 = vpack.c.bf16 %v1715, %v1711
        %v1764 = vpack.c.bf16 %v1716, %v1712
        %v1765 = vpack.c.bf16 %v1721, %v1717
        %v1766 = vpack.c.bf16 %v1722, %v1718
        %v1767 = vpack.c.bf16 %v1723, %v1719
        %v1768 = vpack.c.bf16 %v1724, %v1720
        %v1769 = vpack.c.bf16 %v1729, %v1725
        %v1770 = vpack.c.bf16 %v1730, %v1726
        %v1771 = vpack.c.bf16 %v1731, %v1727
        %v1772 = vpack.c.bf16 %v1732, %v1728
        %v1773 = vpack.c.bf16 %v1737, %v1733
        %v1774 = vpack.c.bf16 %v1738, %v1734
        %v1775 = vpack.c.bf16 %v1739, %v1735
        %v1776 = vpack.c.bf16 %v1740, %v1736
        %v1777 = vpack.c.bf16 %v1745, %v1741
        %v1778 = vpack.c.bf16 %v1746, %v1742
        %v1779 = vpack.c.bf16 %v1747, %v1743
        %v1780 = vpack.c.bf16 %v1748, %v1744
        %v1781 = vld [vmem:[#allocation10] sm:$0xff]
        %v1782 = vld [vmem:[#allocation10 + $0x8] sm:$0xff]
        %v1783 = vld [vmem:[#allocation10 + $0x10] sm:$0xff]
        %v1784 = vld [vmem:[#allocation10 + $0x18] sm:$0xff]
        %v1785 = vld [vmem:[#allocation10 + $0x20] sm:$0xff]
        %v1786 = vld [vmem:[#allocation10 + $0x28] sm:$0xff]
        %v1787 = vld [vmem:[#allocation10 + $0x30] sm:$0xff]
        %v1788 = vld [vmem:[#allocation10 + $0x38] sm:$0xff]
        %v1789 = vld [vmem:[#allocation10 + $0x40] sm:$0xff]
        %v1790 = vld [vmem:[#allocation10 + $0x48] sm:$0xff]
        %v1791 = vld [vmem:[#allocation10 + $0x50] sm:$0xff]
        %v1792 = vld [vmem:[#allocation10 + $0x58] sm:$0xff]
        %v1793 = vld [vmem:[#allocation10 + $0x60] sm:$0xff]
        %v1794 = vld [vmem:[#allocation10 + $0x68] sm:$0xff]
        %v1795 = vld [vmem:[#allocation10 + $0x70] sm:$0xff]
        %v1796 = vld [vmem:[#allocation10 + $0x78] sm:$0xff]
        %v1797 = vld [vmem:[#allocation10 + $0x80] sm:$0xff]
        %v1798 = vld [vmem:[#allocation10 + $0x88] sm:$0xff]
        %v1799 = vld [vmem:[#allocation10 + $0x90] sm:$0xff]
        %v1800 = vld [vmem:[#allocation10 + $0x98] sm:$0xff]
        %v1801 = vld [vmem:[#allocation10 + $0xa0] sm:$0xff]
        %v1802 = vld [vmem:[#allocation10 + $0xa8] sm:$0xff]
        %v1803 = vld [vmem:[#allocation10 + $0xb0] sm:$0xff]
        %v1804 = vld [vmem:[#allocation10 + $0xb8] sm:$0xff]
        %v1805 = vld [vmem:[#allocation10 + $0xc0] sm:$0xff]
        %v1806 = vld [vmem:[#allocation10 + $0xc8] sm:$0xff]
        %v1807 = vld [vmem:[#allocation10 + $0xd0] sm:$0xff]
        %v1808 = vld [vmem:[#allocation10 + $0xd8] sm:$0xff]
        %v1809 = vld [vmem:[#allocation10 + $0xe0] sm:$0xff]
        %v1810 = vld [vmem:[#allocation10 + $0xe8] sm:$0xff]
        %v1811 = vld [vmem:[#allocation10 + $0xf0] sm:$0xff]
        %v1812 = vld [vmem:[#allocation10 + $0xf8] sm:$0xff]
        %v1813 = vld [vmem:[#allocation10 + $0x100] sm:$0xff]
        %v1814 = vld [vmem:[#allocation10 + $0x108] sm:$0xff]
        %v1815 = vld [vmem:[#allocation10 + $0x110] sm:$0xff]
        %v1816 = vld [vmem:[#allocation10 + $0x118] sm:$0xff]
        %v1817 = vld [vmem:[#allocation10 + $0x120] sm:$0xff]
        %v1818 = vld [vmem:[#allocation10 + $0x128] sm:$0xff]
        %v1819 = vld [vmem:[#allocation10 + $0x130] sm:$0xff]
        %v1820 = vld [vmem:[#allocation10 + $0x138] sm:$0xff]
        %v1821 = vld [vmem:[#allocation10 + $0x140] sm:$0xff]
        %v1822 = vld [vmem:[#allocation10 + $0x148] sm:$0xff]
        %v1823 = vld [vmem:[#allocation10 + $0x150] sm:$0xff]
        %v1824 = vld [vmem:[#allocation10 + $0x158] sm:$0xff]
        %v1825 = vld [vmem:[#allocation10 + $0x160] sm:$0xff]
        %v1826 = vld [vmem:[#allocation10 + $0x168] sm:$0xff]
        %v1827 = vld [vmem:[#allocation10 + $0x170] sm:$0xff]
        %v1828 = vld [vmem:[#allocation10 + $0x178] sm:$0xff]
        %v1829 = vld [vmem:[#allocation10 + $0x180] sm:$0xff]
        %v1830 = vld [vmem:[#allocation10 + $0x188] sm:$0xff]
        %v1831 = vld [vmem:[#allocation10 + $0x190] sm:$0xff]
        %v1832 = vld [vmem:[#allocation10 + $0x198] sm:$0xff]
        %v1833 = vld [vmem:[#allocation10 + $0x1a0] sm:$0xff]
        %v1834 = vld [vmem:[#allocation10 + $0x1a8] sm:$0xff]
        %v1835 = vld [vmem:[#allocation10 + $0x1b0] sm:$0xff]
        %v1836 = vld [vmem:[#allocation10 + $0x1b8] sm:$0xff]
        %v1837 = vld [vmem:[#allocation10 + $0x1c0] sm:$0xff]
        %v1838 = vld [vmem:[#allocation10 + $0x1c8] sm:$0xff]
        %v1839 = vld [vmem:[#allocation10 + $0x1d0] sm:$0xff]
        %v1840 = vld [vmem:[#allocation10 + $0x1d8] sm:$0xff]
        %v1841 = vld [vmem:[#allocation10 + $0x1e0] sm:$0xff]
        %v1842 = vld [vmem:[#allocation10 + $0x1e8] sm:$0xff]
        %v1843 = vld [vmem:[#allocation10 + $0x1f0] sm:$0xff]
        %v1844 = vld [vmem:[#allocation10 + $0x1f8] sm:$0xff]
        %v1845 = vld [vmem:[#allocation11] sm:$0x3]
        %v1847 = vlaneseq
        %v1848 = vshrl.u32 %v1847, 7
        %v1849 = vsub.s32 0, %v1848
        %v1850 = vrot.slane %v1845, %v1849
        %v1851 = vlaneseq
        %v1852 = vshrl.u32 %v1851, 7
        %v1853 = vsub.s32 1, %v1852
        %v1854 = vrot.slane %v1845, %v1853
        %v1921 = vunpack.c.l.b16 %v1781
        %v1922 = vunpack.c.h.b16 %v1781
        %v1923 = vunpack.c.l.b16 %v1782
        %v1924 = vunpack.c.h.b16 %v1782
        %v1925 = vunpack.c.l.b16 %v1783
        %v1926 = vunpack.c.h.b16 %v1783
        %v1927 = vunpack.c.l.b16 %v1784
        %v1928 = vunpack.c.h.b16 %v1784
        %v1929 = vunpack.c.l.b16 %v1785
        %v1930 = vunpack.c.h.b16 %v1785
        %v1931 = vunpack.c.l.b16 %v1786
        %v1932 = vunpack.c.h.b16 %v1786
        %v1933 = vunpack.c.l.b16 %v1787
        %v1934 = vunpack.c.h.b16 %v1787
        %v1935 = vunpack.c.l.b16 %v1788
        %v1936 = vunpack.c.h.b16 %v1788
        %v1937 = vunpack.c.l.b16 %v1789
        %v1938 = vunpack.c.h.b16 %v1789
        %v1939 = vunpack.c.l.b16 %v1790
        %v1940 = vunpack.c.h.b16 %v1790
        %v1941 = vunpack.c.l.b16 %v1791
        %v1942 = vunpack.c.h.b16 %v1791
        %v1943 = vunpack.c.l.b16 %v1792
        %v1944 = vunpack.c.h.b16 %v1792
        %v1945 = vunpack.c.l.b16 %v1793
        %v1946 = vunpack.c.h.b16 %v1793
        %v1947 = vunpack.c.l.b16 %v1794
        %v1948 = vunpack.c.h.b16 %v1794
        %v1949 = vunpack.c.l.b16 %v1795
        %v1950 = vunpack.c.h.b16 %v1795
        %v1951 = vunpack.c.l.b16 %v1796
        %v1952 = vunpack.c.h.b16 %v1796
        %v1953 = vunpack.c.l.b16 %v1797
        %v1954 = vunpack.c.h.b16 %v1797
        %v1955 = vunpack.c.l.b16 %v1798
        %v1956 = vunpack.c.h.b16 %v1798
        %v1957 = vunpack.c.l.b16 %v1799
        %v1958 = vunpack.c.h.b16 %v1799
        %v1959 = vunpack.c.l.b16 %v1800
        %v1960 = vunpack.c.h.b16 %v1800
        %v1961 = vunpack.c.l.b16 %v1801
        %v1962 = vunpack.c.h.b16 %v1801
        %v1963 = vunpack.c.l.b16 %v1802
        %v1964 = vunpack.c.h.b16 %v1802
        %v1965 = vunpack.c.l.b16 %v1803
        %v1966 = vunpack.c.h.b16 %v1803
        %v1967 = vunpack.c.l.b16 %v1804
        %v1968 = vunpack.c.h.b16 %v1804
        %v1969 = vunpack.c.l.b16 %v1805
        %v1970 = vunpack.c.h.b16 %v1805
        %v1971 = vunpack.c.l.b16 %v1806
        %v1972 = vunpack.c.h.b16 %v1806
        %v1973 = vunpack.c.l.b16 %v1807
        %v1974 = vunpack.c.h.b16 %v1807
        %v1975 = vunpack.c.l.b16 %v1808
        %v1976 = vunpack.c.h.b16 %v1808
        %v1977 = vunpack.c.l.b16 %v1809
        %v1978 = vunpack.c.h.b16 %v1809
        %v1979 = vunpack.c.l.b16 %v1810
        %v1980 = vunpack.c.h.b16 %v1810
        %v1981 = vunpack.c.l.b16 %v1811
        %v1982 = vunpack.c.h.b16 %v1811
        %v1983 = vunpack.c.l.b16 %v1812
        %v1984 = vunpack.c.h.b16 %v1812
        %v1985 = vunpack.c.l.b16 %v1813
        %v1986 = vunpack.c.h.b16 %v1813
        %v1987 = vunpack.c.l.b16 %v1814
        %v1988 = vunpack.c.h.b16 %v1814
        %v1989 = vunpack.c.l.b16 %v1815
        %v1990 = vunpack.c.h.b16 %v1815
        %v1991 = vunpack.c.l.b16 %v1816
        %v1992 = vunpack.c.h.b16 %v1816
        %v1993 = vunpack.c.l.b16 %v1817
        %v1994 = vunpack.c.h.b16 %v1817
        %v1995 = vunpack.c.l.b16 %v1818
        %v1996 = vunpack.c.h.b16 %v1818
        %v1997 = vunpack.c.l.b16 %v1819
        %v1998 = vunpack.c.h.b16 %v1819
        %v1999 = vunpack.c.l.b16 %v1820
        %v2000 = vunpack.c.h.b16 %v1820
        %v2001 = vunpack.c.l.b16 %v1821
        %v2002 = vunpack.c.h.b16 %v1821
        %v2003 = vunpack.c.l.b16 %v1822
        %v2004 = vunpack.c.h.b16 %v1822
        %v2005 = vunpack.c.l.b16 %v1823
        %v2006 = vunpack.c.h.b16 %v1823
        %v2007 = vunpack.c.l.b16 %v1824
        %v2008 = vunpack.c.h.b16 %v1824
        %v2009 = vunpack.c.l.b16 %v1825
        %v2010 = vunpack.c.h.b16 %v1825
        %v2011 = vunpack.c.l.b16 %v1826
        %v2012 = vunpack.c.h.b16 %v1826
        %v2013 = vunpack.c.l.b16 %v1827
        %v2014 = vunpack.c.h.b16 %v1827
        %v2015 = vunpack.c.l.b16 %v1828
        %v2016 = vunpack.c.h.b16 %v1828
        %v2017 = vunpack.c.l.b16 %v1829
        %v2018 = vunpack.c.h.b16 %v1829
        %v2019 = vunpack.c.l.b16 %v1830
        %v2020 = vunpack.c.h.b16 %v1830
        %v2021 = vunpack.c.l.b16 %v1831
        %v2022 = vunpack.c.h.b16 %v1831
        %v2023 = vunpack.c.l.b16 %v1832
        %v2024 = vunpack.c.h.b16 %v1832
        %v2025 = vunpack.c.l.b16 %v1833
        %v2026 = vunpack.c.h.b16 %v1833
        %v2027 = vunpack.c.l.b16 %v1834
        %v2028 = vunpack.c.h.b16 %v1834
        %v2029 = vunpack.c.l.b16 %v1835
        %v2030 = vunpack.c.h.b16 %v1835
        %v2031 = vunpack.c.l.b16 %v1836
        %v2032 = vunpack.c.h.b16 %v1836
        %v2033 = vunpack.c.l.b16 %v1837
        %v2034 = vunpack.c.h.b16 %v1837
        %v2035 = vunpack.c.l.b16 %v1838
        %v2036 = vunpack.c.h.b16 %v1838
        %v2037 = vunpack.c.l.b16 %v1839
        %v2038 = vunpack.c.h.b16 %v1839
        %v2039 = vunpack.c.l.b16 %v1840
        %v2040 = vunpack.c.h.b16 %v1840
        %v2041 = vunpack.c.l.b16 %v1841
        %v2042 = vunpack.c.h.b16 %v1841
        %v2043 = vunpack.c.l.b16 %v1842
        %v2044 = vunpack.c.h.b16 %v1842
        %v2045 = vunpack.c.l.b16 %v1843
        %v2046 = vunpack.c.h.b16 %v1843
        %v2047 = vunpack.c.l.b16 %v1844
        %v2048 = vunpack.c.h.b16 %v1844
        %v2049 = vpack.c.b16 %v1923, %v1921
        %v2050 = vpack.c.b16 %v1924, %v1922
        %v2051 = vpack.c.b16 %v1927, %v1925
        %v2052 = vpack.c.b16 %v1928, %v1926
        %v2053 = vpack.c.b16 %v1931, %v1929
        %v2054 = vpack.c.b16 %v1932, %v1930
        %v2055 = vpack.c.b16 %v1935, %v1933
        %v2056 = vpack.c.b16 %v1936, %v1934
        %v2057 = vpack.c.b16 %v1939, %v1937
        %v2058 = vpack.c.b16 %v1940, %v1938
        %v2059 = vpack.c.b16 %v1943, %v1941
        %v2060 = vpack.c.b16 %v1944, %v1942
        %v2061 = vpack.c.b16 %v1947, %v1945
        %v2062 = vpack.c.b16 %v1948, %v1946
        %v2063 = vpack.c.b16 %v1951, %v1949
        %v2064 = vpack.c.b16 %v1952, %v1950
        %v2065 = vpack.c.b16 %v1955, %v1953
        %v2066 = vpack.c.b16 %v1956, %v1954
        %v2067 = vpack.c.b16 %v1959, %v1957
        %v2068 = vpack.c.b16 %v1960, %v1958
        %v2069 = vpack.c.b16 %v1963, %v1961
        %v2070 = vpack.c.b16 %v1964, %v1962
        %v2071 = vpack.c.b16 %v1967, %v1965
        %v2072 = vpack.c.b16 %v1968, %v1966
        %v2073 = vpack.c.b16 %v1971, %v1969
        %v2074 = vpack.c.b16 %v1972, %v1970
        %v2075 = vpack.c.b16 %v1975, %v1973
        %v2076 = vpack.c.b16 %v1976, %v1974
        %v2077 = vpack.c.b16 %v1979, %v1977
        %v2078 = vpack.c.b16 %v1980, %v1978
        %v2079 = vpack.c.b16 %v1983, %v1981
        %v2080 = vpack.c.b16 %v1984, %v1982
        %v2081 = vpack.c.b16 %v1987, %v1985
        %v2082 = vpack.c.b16 %v1988, %v1986
        %v2083 = vpack.c.b16 %v1991, %v1989
        %v2084 = vpack.c.b16 %v1992, %v1990
        %v2085 = vpack.c.b16 %v1995, %v1993
        %v2086 = vpack.c.b16 %v1996, %v1994
        %v2087 = vpack.c.b16 %v1999, %v1997
        %v2088 = vpack.c.b16 %v2000, %v1998
        %v2089 = vpack.c.b16 %v2003, %v2001
        %v2090 = vpack.c.b16 %v2004, %v2002
        %v2091 = vpack.c.b16 %v2007, %v2005
        %v2092 = vpack.c.b16 %v2008, %v2006
        %v2093 = vpack.c.b16 %v2011, %v2009
        %v2094 = vpack.c.b16 %v2012, %v2010
        %v2095 = vpack.c.b16 %v2015, %v2013
        %v2096 = vpack.c.b16 %v2016, %v2014
        %v2097 = vpack.c.b16 %v2019, %v2017
        %v2098 = vpack.c.b16 %v2020, %v2018
        %v2099 = vpack.c.b16 %v2023, %v2021
        %v2100 = vpack.c.b16 %v2024, %v2022
        %v2101 = vpack.c.b16 %v2027, %v2025
        %v2102 = vpack.c.b16 %v2028, %v2026
        %v2103 = vpack.c.b16 %v2031, %v2029
        %v2104 = vpack.c.b16 %v2032, %v2030
        %v2105 = vpack.c.b16 %v2035, %v2033
        %v2106 = vpack.c.b16 %v2036, %v2034
        %v2107 = vpack.c.b16 %v2039, %v2037
        %v2108 = vpack.c.b16 %v2040, %v2038
        %v2109 = vpack.c.b16 %v2043, %v2041
        %v2110 = vpack.c.b16 %v2044, %v2042
        %v2111 = vpack.c.b16 %v2047, %v2045
        %v2112 = vpack.c.b16 %v2048, %v2046
        %2177 = vmatprep.subr.bf16.mxu0 %v2050
        %2178 = vmatpush1.bf16.msra.mxu0 %v2049
        %2179 = vmatprep.subr.bf16.mxu0 %v2052
        %2180 = vmatpush1.bf16.msra.mxu0 %v2051
        %2181 = vmatprep.subr.bf16.mxu0 %v2054
        %2182 = vmatpush1.bf16.msra.mxu0 %v2053
        %2183 = vmatprep.subr.bf16.mxu0 %v2056
        %2184 = vmatpush1.bf16.msra.mxu0 %v2055
        %2185 = vmatprep.subr.bf16.mxu0 %v2058
        %2186 = vmatpush1.bf16.msra.mxu0 %v2057
        %2187 = vmatprep.subr.bf16.mxu0 %v2060
        %2188 = vmatpush1.bf16.msra.mxu0 %v2059
        %2189 = vmatprep.subr.bf16.mxu0 %v2062
        %2190 = vmatpush1.bf16.msra.mxu0 %v2061
        %2191 = vmatprep.subr.bf16.mxu0 %v2064
        %2192 = vmatpush1.bf16.msra.mxu0 %v2063
        %2193 = vmatprep.subr.bf16.mxu0 %v2066
        %2194 = vmatpush1.bf16.msra.mxu0 %v2065
        %2195 = vmatprep.subr.bf16.mxu0 %v2068
        %2196 = vmatpush1.bf16.msra.mxu0 %v2067
        %2197 = vmatprep.subr.bf16.mxu0 %v2070
        %2198 = vmatpush1.bf16.msra.mxu0 %v2069
        %2199 = vmatprep.subr.bf16.mxu0 %v2072
        %2200 = vmatpush1.bf16.msra.mxu0 %v2071
        %2201 = vmatprep.subr.bf16.mxu0 %v2074
        %2202 = vmatpush1.bf16.msra.mxu0 %v2073
        %2203 = vmatprep.subr.bf16.mxu0 %v2076
        %2204 = vmatpush1.bf16.msra.mxu0 %v2075
        %2205 = vmatprep.subr.bf16.mxu0 %v2078
        %2206 = vmatpush1.bf16.msra.mxu0 %v2077
        %2207 = vmatprep.subr.bf16.mxu0 %v2080
        %2208 = vmatpush1.bf16.msra.mxu0 %v2079
        %2209 = vmatprep.mubr.bf16.mxu0 %v1750
        %2210 = vmatmul.mubr.bf16.gmra.mrb[0].mxu0 %v1749
        %v2211 = vpop.f32.mrb[0].mxu0
        %v2212 = vadd.f32 %v1850, %v2211
        %v2213 = vpop.f32.mrb[0].mxu0
        %v2214 = vadd.f32 %v1854, %v2213
        %v2215 = vpop.f32.mrb[0].mxu0
        %v2216 = vadd.f32 %v1850, %v2215
        %v2217 = vpop.f32.mrb[0].mxu0
        %v2218 = vadd.f32 %v1854, %v2217
        %2219 = vmatprep.mubr.bf16.mxu0 %v1754
        %2220 = vmatmul.mubr.bf16.gmra.mrb[0].mxu0 %v1753
        %v2221 = vpop.f32.mrb[0].mxu0
        %v2222 = vadd.f32 %v1850, %v2221
        %v2223 = vpop.f32.mrb[0].mxu0
        %v2224 = vadd.f32 %v1854, %v2223
        %v2225 = vpop.f32.mrb[0].mxu0
        %v2226 = vadd.f32 %v1850, %v2225
        %v2227 = vpop.f32.mrb[0].mxu0
        %v2228 = vadd.f32 %v1854, %v2227
        %2229 = vmatprep.mubr.bf16.mxu0 %v1758
        %2230 = vmatmul.mubr.bf16.gmra.mrb[0].mxu0 %v1757
        %v2231 = vpop.f32.mrb[0].mxu0
        %v2232 = vadd.f32 %v1850, %v2231
        %v2233 = vpop.f32.mrb[0].mxu0
        %v2234 = vadd.f32 %v1854, %v2233
        %v2235 = vpop.f32.mrb[0].mxu0
        %v2236 = vadd.f32 %v1850, %v2235
        %v2237 = vpop.f32.mrb[0].mxu0
        %v2238 = vadd.f32 %v1854, %v2237
        %2239 = vmatprep.mubr.bf16.mxu0 %v1762
        %2240 = vmatmul.mubr.bf16.gmra.mrb[0].mxu0 %v1761
        %v2241 = vpop.f32.mrb[0].mxu0
        %v2242 = vadd.f32 %v1850, %v2241
        %v2243 = vpop.f32.mrb[0].mxu0
        %v2244 = vadd.f32 %v1854, %v2243
        %v2245 = vpop.f32.mrb[0].mxu0
        %v2246 = vadd.f32 %v1850, %v2245
        %v2247 = vpop.f32.mrb[0].mxu0
        %v2248 = vadd.f32 %v1854, %v2247
        %2249 = vmatprep.mubr.bf16.mxu0 %v1766
        %2250 = vmatmul.mubr.bf16.gmra.mrb[0].mxu0 %v1765
        %v2251 = vpop.f32.mrb[0].mxu0
        %v2252 = vadd.f32 %v1850, %v2251
        %v2253 = vpop.f32.mrb[0].mxu0
        %v2254 = vadd.f32 %v1854, %v2253
        %v2255 = vpop.f32.mrb[0].mxu0
        %v2256 = vadd.f32 %v1850, %v2255
        %v2257 = vpop.f32.mrb[0].mxu0
        %v2258 = vadd.f32 %v1854, %v2257
        %2259 = vmatprep.mubr.bf16.mxu0 %v1770
        %2260 = vmatmul.mubr.bf16.gmra.mrb[0].mxu0 %v1769
        %v2261 = vpop.f32.mrb[0].mxu0
        %v2262 = vadd.f32 %v1850, %v2261
        %v2263 = vpop.f32.mrb[0].mxu0
        %v2264 = vadd.f32 %v1854, %v2263
        %v2265 = vpop.f32.mrb[0].mxu0
        %v2266 = vadd.f32 %v1850, %v2265
        %v2267 = vpop.f32.mrb[0].mxu0
        %v2268 = vadd.f32 %v1854, %v2267
        %2269 = vmatprep.mubr.bf16.mxu0 %v1774
        %2270 = vmatmul.mubr.bf16.gmra.mrb[0].mxu0 %v1773
        %v2271 = vpop.f32.mrb[0].mxu0
        %v2272 = vadd.f32 %v1850, %v2271
        %v2273 = vpop.f32.mrb[0].mxu0
        %v2274 = vadd.f32 %v1854, %v2273
        %v2275 = vpop.f32.mrb[0].mxu0
        %v2276 = vadd.f32 %v1850, %v2275
        %v2277 = vpop.f32.mrb[0].mxu0
        %v2278 = vadd.f32 %v1854, %v2277
        %2279 = vmatprep.mubr.bf16.mxu0 %v1778
        %2280 = vmatmul.mubr.bf16.gmra.mrb[0].mxu0 %v1777
        %v2281 = vpop.f32.mrb[0].mxu0
        %v2282 = vadd.f32 %v1850, %v2281
        %v2283 = vpop.f32.mrb[0].mxu0
        %v2284 = vadd.f32 %v1854, %v2283
        %v2285 = vpop.f32.mrb[0].mxu0
        %v2286 = vadd.f32 %v1850, %v2285
        %v2287 = vpop.f32.mrb[0].mxu0
        %v2288 = vadd.f32 %v1854, %v2287
        %2289 = vdwg.mxu0
        %2290 = vmatprep.subr.bf16.mxu0 %v2082
        %2291 = vmatpush1.bf16.msra.mxu0 %v2081
        %2292 = vmatprep.subr.bf16.mxu0 %v2084
        %2293 = vmatpush1.bf16.msra.mxu0 %v2083
        %2294 = vmatprep.subr.bf16.mxu0 %v2086
        %2295 = vmatpush1.bf16.msra.mxu0 %v2085
        %2296 = vmatprep.subr.bf16.mxu0 %v2088
        %2297 = vmatpush1.bf16.msra.mxu0 %v2087
        %2298 = vmatprep.subr.bf16.mxu0 %v2090
        %2299 = vmatpush1.bf16.msra.mxu0 %v2089
        %2300 = vmatprep.subr.bf16.mxu0 %v2092
        %2301 = vmatpush1.bf16.msra.mxu0 %v2091
        %2302 = vmatprep.subr.bf16.mxu0 %v2094
        %2303 = vmatpush1.bf16.msra.mxu0 %v2093
        %2304 = vmatprep.subr.bf16.mxu0 %v2096
        %2305 = vmatpush1.bf16.msra.mxu0 %v2095
        %2306 = vmatprep.subr.bf16.mxu0 %v2098
        %2307 = vmatpush1.bf16.msra.mxu0 %v2097
        %2308 = vmatprep.subr.bf16.mxu0 %v2100
        %2309 = vmatpush1.bf16.msra.mxu0 %v2099
        %2310 = vmatprep.subr.bf16.mxu0 %v2102
        %2311 = vmatpush1.bf16.msra.mxu0 %v2101
        %2312 = vmatprep.subr.bf16.mxu0 %v2104
        %2313 = vmatpush1.bf16.msra.mxu0 %v2103
        %2314 = vmatprep.subr.bf16.mxu0 %v2106
        %2315 = vmatpush1.bf16.msra.mxu0 %v2105
        %2316 = vmatprep.subr.bf16.mxu0 %v2108
        %2317 = vmatpush1.bf16.msra.mxu0 %v2107
        %2318 = vmatprep.subr.bf16.mxu0 %v2110
        %2319 = vmatpush1.bf16.msra.mxu0 %v2109
        %2320 = vmatprep.subr.bf16.mxu0 %v2112
        %2321 = vmatpush1.bf16.msra.mxu0 %v2111
        %2322 = vmatprep.mubr.bf16.mxu0 %v1752
        %2323 = vmatmul.mubr.bf16.gmra.mrb[0].mxu0 %v1751
        %v2324 = vpop.f32.mrb[0].mxu0
        %v2325 = vadd.f32 %v2212, %v2324
        %v2326 = vpop.f32.mrb[0].mxu0
        %v2327 = vadd.f32 %v2214, %v2326
        %v2328 = vpop.f32.mrb[0].mxu0
        %v2329 = vadd.f32 %v2216, %v2328
        %v2330 = vpop.f32.mrb[0].mxu0
        %v2331 = vadd.f32 %v2218, %v2330
        %2332 = vmatprep.mubr.bf16.mxu0 %v1756
        %2333 = vmatmul.mubr.bf16.gmra.mrb[0].mxu0 %v1755
        %v2334 = vpop.f32.mrb[0].mxu0
        %v2335 = vadd.f32 %v2222, %v2334
        %v2336 = vpop.f32.mrb[0].mxu0
        %v2337 = vadd.f32 %v2224, %v2336
        %v2338 = vpop.f32.mrb[0].mxu0
        %v2339 = vadd.f32 %v2226, %v2338
        %v2340 = vpop.f32.mrb[0].mxu0
        %v2341 = vadd.f32 %v2228, %v2340
        %2342 = vmatprep.mubr.bf16.mxu0 %v1760
        %2343 = vmatmul.mubr.bf16.gmra.mrb[0].mxu0 %v1759
        %v2344 = vpop.f32.mrb[0].mxu0
        %v2345 = vadd.f32 %v2232, %v2344
        %v2346 = vpop.f32.mrb[0].mxu0
        %v2347 = vadd.f32 %v2234, %v2346
        %v2348 = vpop.f32.mrb[0].mxu0
        %v2349 = vadd.f32 %v2236, %v2348
        %v2350 = vpop.f32.mrb[0].mxu0
        %v2351 = vadd.f32 %v2238, %v2350
        %2352 = vmatprep.mubr.bf16.mxu0 %v1764
        %2353 = vmatmul.mubr.bf16.gmra.mrb[0].mxu0 %v1763
        %v2354 = vpop.f32.mrb[0].mxu0
        %v2355 = vadd.f32 %v2242, %v2354
        %v2356 = vpop.f32.mrb[0].mxu0
        %v2357 = vadd.f32 %v2244, %v2356
        %v2358 = vpop.f32.mrb[0].mxu0
        %v2359 = vadd.f32 %v2246, %v2358
        %v2360 = vpop.f32.mrb[0].mxu0
        %v2361 = vadd.f32 %v2248, %v2360
        %2362 = vmatprep.mubr.bf16.mxu0 %v1768
        %2363 = vmatmul.mubr.bf16.gmra.mrb[0].mxu0 %v1767
        %v2364 = vpop.f32.mrb[0].mxu0
        %v2365 = vadd.f32 %v2252, %v2364
        %v2366 = vpop.f32.mrb[0].mxu0
        %v2367 = vadd.f32 %v2254, %v2366
        %v2368 = vpop.f32.mrb[0].mxu0
        %v2369 = vadd.f32 %v2256, %v2368
        %v2370 = vpop.f32.mrb[0].mxu0
        %v2371 = vadd.f32 %v2258, %v2370
        %2372 = vmatprep.mubr.bf16.mxu0 %v1772
        %2373 = vmatmul.mubr.bf16.gmra.mrb[0].mxu0 %v1771
        %v2374 = vpop.f32.mrb[0].mxu0
        %v2375 = vadd.f32 %v2262, %v2374
        %v2376 = vpop.f32.mrb[0].mxu0
        %v2377 = vadd.f32 %v2264, %v2376
        %v2378 = vpop.f32.mrb[0].mxu0
        %v2379 = vadd.f32 %v2266, %v2378
        %v2380 = vpop.f32.mrb[0].mxu0
        %v2381 = vadd.f32 %v2268, %v2380
        %2382 = vmatprep.mubr.bf16.mxu0 %v1776
        %2383 = vmatmul.mubr.bf16.gmra.mrb[0].mxu0 %v1775
        %v2384 = vpop.f32.mrb[0].mxu0
        %v2385 = vadd.f32 %v2272, %v2384
        %v2386 = vpop.f32.mrb[0].mxu0
        %v2387 = vadd.f32 %v2274, %v2386
        %v2388 = vpop.f32.mrb[0].mxu0
        %v2389 = vadd.f32 %v2276, %v2388
        %v2390 = vpop.f32.mrb[0].mxu0
        %v2391 = vadd.f32 %v2278, %v2390
        %2392 = vmatprep.mubr.bf16.mxu0 %v1780
        %2393 = vmatmul.mubr.bf16.gmra.mrb[0].mxu0 %v1779
        %v2394 = vpop.f32.mrb[0].mxu0
        %v2395 = vadd.f32 %v2282, %v2394
        %v2396 = vpop.f32.mrb[0].mxu0
        %v2397 = vadd.f32 %v2284, %v2396
        %v2398 = vpop.f32.mrb[0].mxu0
        %v2399 = vadd.f32 %v2286, %v2398
        %v2400 = vpop.f32.mrb[0].mxu0
        %v2401 = vadd.f32 %v2288, %v2400
        %2402 = vdwg.mxu0
        %v2403 = vmax.f32 %v2325, 0.0
        %v2404 = vmax.f32 %v2327, 0.0
        %v2405 = vmax.f32 %v2329, 0.0
        %v2406 = vmax.f32 %v2331, 0.0
        %v2407 = vmax.f32 %v2335, 0.0
        %v2408 = vmax.f32 %v2337, 0.0
        %v2409 = vmax.f32 %v2339, 0.0
        %v2410 = vmax.f32 %v2341, 0.0
        %v2411 = vmax.f32 %v2345, 0.0
        %v2412 = vmax.f32 %v2347, 0.0
        %v2413 = vmax.f32 %v2349, 0.0
        %v2414 = vmax.f32 %v2351, 0.0
        %v2415 = vmax.f32 %v2355, 0.0
        %v2416 = vmax.f32 %v2357, 0.0
        %v2417 = vmax.f32 %v2359, 0.0
        %v2418 = vmax.f32 %v2361, 0.0
        %v2419 = vmax.f32 %v2365, 0.0
        %v2420 = vmax.f32 %v2367, 0.0
        %v2421 = vmax.f32 %v2369, 0.0
        %v2422 = vmax.f32 %v2371, 0.0
        %v2423 = vmax.f32 %v2375, 0.0
        %v2424 = vmax.f32 %v2377, 0.0
        %v2425 = vmax.f32 %v2379, 0.0
        %v2426 = vmax.f32 %v2381, 0.0
        %v2427 = vmax.f32 %v2385, 0.0
        %v2428 = vmax.f32 %v2387, 0.0
        %v2429 = vmax.f32 %v2389, 0.0
        %v2430 = vmax.f32 %v2391, 0.0
        %v2431 = vmax.f32 %v2395, 0.0
        %v2432 = vmax.f32 %v2397, 0.0
        %v2433 = vmax.f32 %v2399, 0.0
        %v2434 = vmax.f32 %v2401, 0.0
        %v2435 = vpack.c.bf16 %v2405, %v2403
        %v2436 = vpack.c.bf16 %v2406, %v2404
        %v2437 = vpack.c.bf16 %v2409, %v2407
        %v2438 = vpack.c.bf16 %v2410, %v2408
        %v2439 = vpack.c.bf16 %v2413, %v2411
        %v2440 = vpack.c.bf16 %v2414, %v2412
        %v2441 = vpack.c.bf16 %v2417, %v2415
        %v2442 = vpack.c.bf16 %v2418, %v2416
        %v2443 = vpack.c.bf16 %v2421, %v2419
        %v2444 = vpack.c.bf16 %v2422, %v2420
        %v2445 = vpack.c.bf16 %v2425, %v2423
        %v2446 = vpack.c.bf16 %v2426, %v2424
        %v2447 = vpack.c.bf16 %v2429, %v2427
        %v2448 = vpack.c.bf16 %v2430, %v2428
        %v2449 = vpack.c.bf16 %v2433, %v2431
        %v2450 = vpack.c.bf16 %v2434, %v2432
        %v2451 = vld [vmem:[%s9] sm:$0xf]
        %v2452 = vld [vmem:[%s9 + $0x4] sm:$0xf]
        %v2453 = vld [vmem:[%s9 + $0x8] sm:$0xf]
        %v2454 = vld [vmem:[%s9 + $0xc] sm:$0xf]
        %v2455 = vld [vmem:[%s9 + $0x10] sm:$0xf]
        %v2456 = vld [vmem:[%s9 + $0x14] sm:$0xf]
        %v2457 = vld [vmem:[%s9 + $0x18] sm:$0xf]
        %v2458 = vld [vmem:[%s9 + $0x1c] sm:$0xf]
        %v2459 = vld [vmem:[%s9 + $0x20] sm:$0xf]
        %v2460 = vld [vmem:[%s9 + $0x24] sm:$0xf]
        %v2461 = vld [vmem:[%s9 + $0x28] sm:$0xf]
        %v2462 = vld [vmem:[%s9 + $0x2c] sm:$0xf]
        %v2463 = vld [vmem:[%s9 + $0x30] sm:$0xf]
        %v2464 = vld [vmem:[%s9 + $0x34] sm:$0xf]
        %v2465 = vld [vmem:[%s9 + $0x38] sm:$0xf]
        %v2466 = vld [vmem:[%s9 + $0x3c] sm:$0xf]
        %v2467 = vld [vmem:[%s9 + $0x40] sm:$0xf]
        %v2468 = vld [vmem:[%s9 + $0x44] sm:$0xf]
        %v2469 = vld [vmem:[%s9 + $0x48] sm:$0xf]
        %v2470 = vld [vmem:[%s9 + $0x4c] sm:$0xf]
        %v2471 = vld [vmem:[%s9 + $0x50] sm:$0xf]
        %v2472 = vld [vmem:[%s9 + $0x54] sm:$0xf]
        %v2473 = vld [vmem:[%s9 + $0x58] sm:$0xf]
        %v2474 = vld [vmem:[%s9 + $0x5c] sm:$0xf]
        %v2475 = vld [vmem:[%s9 + $0x60] sm:$0xf]
        %v2476 = vld [vmem:[%s9 + $0x64] sm:$0xf]
        %v2477 = vld [vmem:[%s9 + $0x68] sm:$0xf]
        %v2478 = vld [vmem:[%s9 + $0x6c] sm:$0xf]
        %v2479 = vld [vmem:[%s9 + $0x70] sm:$0xf]
        %v2480 = vld [vmem:[%s9 + $0x74] sm:$0xf]
        %v2481 = vld [vmem:[%s9 + $0x78] sm:$0xf]
        %v2482 = vld [vmem:[%s9 + $0x7c] sm:$0xf]
        %v2483 = vld [vmem:[%s10] sm:$0x1]
        %v2485 = vlaneseq
        %v2486 = vshrl.u32 %v2485, 7
        %v2487 = vsub.s32 0, %v2486
        %v2488 = vrot.slane %v2483, %v2487
        %v2522 = vunpack.c.l.b16 %v2451
        %v2523 = vunpack.c.l.b16 %v2452
        %v2524 = vunpack.c.l.b16 %v2453
        %v2525 = vunpack.c.l.b16 %v2454
        %v2526 = vunpack.c.l.b16 %v2455
        %v2527 = vunpack.c.l.b16 %v2456
        %v2528 = vunpack.c.l.b16 %v2457
        %v2529 = vunpack.c.l.b16 %v2458
        %v2530 = vunpack.c.l.b16 %v2459
        %v2531 = vunpack.c.l.b16 %v2460
        %v2532 = vunpack.c.l.b16 %v2461
        %v2533 = vunpack.c.l.b16 %v2462
        %v2534 = vunpack.c.l.b16 %v2463
        %v2535 = vunpack.c.l.b16 %v2464
        %v2536 = vunpack.c.l.b16 %v2465
        %v2537 = vunpack.c.l.b16 %v2466
        %v2538 = vunpack.c.l.b16 %v2467
        %v2539 = vunpack.c.l.b16 %v2468
        %v2540 = vunpack.c.l.b16 %v2469
        %v2541 = vunpack.c.l.b16 %v2470
        %v2542 = vunpack.c.l.b16 %v2471
        %v2543 = vunpack.c.l.b16 %v2472
        %v2544 = vunpack.c.l.b16 %v2473
        %v2545 = vunpack.c.l.b16 %v2474
        %v2546 = vunpack.c.l.b16 %v2475
        %v2547 = vunpack.c.l.b16 %v2476
        %v2548 = vunpack.c.l.b16 %v2477
        %v2549 = vunpack.c.l.b16 %v2478
        %v2550 = vunpack.c.l.b16 %v2479
        %v2551 = vunpack.c.l.b16 %v2480
        %v2552 = vunpack.c.l.b16 %v2481
        %v2553 = vunpack.c.l.b16 %v2482
        %v2554 = vpack.c.b16 %v2523, %v2522
        %v2555 = vpack.c.b16 %v2525, %v2524
        %v2556 = vpack.c.b16 %v2527, %v2526
        %v2557 = vpack.c.b16 %v2529, %v2528
        %v2558 = vpack.c.b16 %v2531, %v2530
        %v2559 = vpack.c.b16 %v2533, %v2532
        %v2560 = vpack.c.b16 %v2535, %v2534
        %v2561 = vpack.c.b16 %v2537, %v2536
        %v2562 = vpack.c.b16 %v2539, %v2538
        %v2563 = vpack.c.b16 %v2541, %v2540
        %v2564 = vpack.c.b16 %v2543, %v2542
        %v2565 = vpack.c.b16 %v2545, %v2544
        %v2566 = vpack.c.b16 %v2547, %v2546
        %v2567 = vpack.c.b16 %v2549, %v2548
        %v2568 = vpack.c.b16 %v2551, %v2550
        %v2569 = vpack.c.b16 %v2553, %v2552
        %2586 = vmatprep.subr.bf16.mxu0 0
        %2587 = vmatpush1.bf16.msra.mxu0 %v2554
        %2588 = vmatprep.subr.bf16.mxu0 0
        %2589 = vmatpush1.bf16.msra.mxu0 %v2555
        %2590 = vmatprep.subr.bf16.mxu0 0
        %2591 = vmatpush1.bf16.msra.mxu0 %v2556
        %2592 = vmatprep.subr.bf16.mxu0 0
        %2593 = vmatpush1.bf16.msra.mxu0 %v2557
        %2594 = vmatprep.subr.bf16.mxu0 0
        %2595 = vmatpush1.bf16.msra.mxu0 %v2558
        %2596 = vmatprep.subr.bf16.mxu0 0
        %2597 = vmatpush1.bf16.msra.mxu0 %v2559
        %2598 = vmatprep.subr.bf16.mxu0 0
        %2599 = vmatpush1.bf16.msra.mxu0 %v2560
        %2600 = vmatprep.subr.bf16.mxu0 0
        %2601 = vmatpush1.bf16.msra.mxu0 %v2561
        %2602 = vmatprep.subr.bf16.mxu0 0
        %2603 = vmatpush1.bf16.msra.mxu0 %v2562
        %2604 = vmatprep.subr.bf16.mxu0 0
        %2605 = vmatpush1.bf16.msra.mxu0 %v2563
        %2606 = vmatprep.subr.bf16.mxu0 0
        %2607 = vmatpush1.bf16.msra.mxu0 %v2564
        %2608 = vmatprep.subr.bf16.mxu0 0
        %2609 = vmatpush1.bf16.msra.mxu0 %v2565
        %2610 = vmatprep.subr.bf16.mxu0 0
        %2611 = vmatpush1.bf16.msra.mxu0 %v2566
        %2612 = vmatprep.subr.bf16.mxu0 0
        %2613 = vmatpush1.bf16.msra.mxu0 %v2567
        %2614 = vmatprep.subr.bf16.mxu0 0
        %2615 = vmatpush1.bf16.msra.mxu0 %v2568
        %2616 = vmatprep.subr.bf16.mxu0 0
        %2617 = vmatpush1.bf16.msra.mxu0 %v2569
        %2618 = vmatprep.mubr.bf16.mxu0 %v2436
        %2619 = vmatmul.mubr.bf16.gmra.mrb[0].mxu0 %v2435
        %v2620 = vpop.f32.mrb[0].mxu0
        %v2621 = vadd.f32 %v2488, %v2620
        %v2622 = vpop.f32.mrb[0].mxu0
        %v2623 = vpop.f32.mrb[0].mxu0
        %v2624 = vadd.f32 %v2488, %v2623
        %v2625 = vpop.f32.mrb[0].mxu0
        %2626 = vmatprep.mubr.bf16.mxu0 %v2438
        %2627 = vmatmul.mubr.bf16.gmra.mrb[0].mxu0 %v2437
        %v2628 = vpop.f32.mrb[0].mxu0
        %v2629 = vadd.f32 %v2488, %v2628
        %v2630 = vpop.f32.mrb[0].mxu0
        %v2631 = vpop.f32.mrb[0].mxu0
        %v2632 = vadd.f32 %v2488, %v2631
        %v2633 = vpop.f32.mrb[0].mxu0
        %2634 = vmatprep.mubr.bf16.mxu0 %v2440
        %2635 = vmatmul.mubr.bf16.gmra.mrb[0].mxu0 %v2439
        %v2636 = vpop.f32.mrb[0].mxu0
        %v2637 = vadd.f32 %v2488, %v2636
        %v2638 = vpop.f32.mrb[0].mxu0
        %v2639 = vpop.f32.mrb[0].mxu0
        %v2640 = vadd.f32 %v2488, %v2639
        %v2641 = vpop.f32.mrb[0].mxu0
        %2642 = vmatprep.mubr.bf16.mxu0 %v2442
        %2643 = vmatmul.mubr.bf16.gmra.mrb[0].mxu0 %v2441
        %v2644 = vpop.f32.mrb[0].mxu0
        %v2645 = vadd.f32 %v2488, %v2644
        %v2646 = vpop.f32.mrb[0].mxu0
        %v2647 = vpop.f32.mrb[0].mxu0
        %v2648 = vadd.f32 %v2488, %v2647
        %v2649 = vpop.f32.mrb[0].mxu0
        %2650 = vmatprep.mubr.bf16.mxu0 %v2444
        %2651 = vmatmul.mubr.bf16.gmra.mrb[0].mxu0 %v2443
        %v2652 = vpop.f32.mrb[0].mxu0
        %v2653 = vadd.f32 %v2488, %v2652
        %v2654 = vpop.f32.mrb[0].mxu0
        %v2655 = vpop.f32.mrb[0].mxu0
        %v2656 = vadd.f32 %v2488, %v2655
        %v2657 = vpop.f32.mrb[0].mxu0
        %2658 = vmatprep.mubr.bf16.mxu0 %v2446
        %2659 = vmatmul.mubr.bf16.gmra.mrb[0].mxu0 %v2445
        %v2660 = vpop.f32.mrb[0].mxu0
        %v2661 = vadd.f32 %v2488, %v2660
        %v2662 = vpop.f32.mrb[0].mxu0
        %v2663 = vpop.f32.mrb[0].mxu0
        %v2664 = vadd.f32 %v2488, %v2663
        %v2665 = vpop.f32.mrb[0].mxu0
        %2666 = vmatprep.mubr.bf16.mxu0 %v2448
        %2667 = vmatmul.mubr.bf16.gmra.mrb[0].mxu0 %v2447
        %v2668 = vpop.f32.mrb[0].mxu0
        %v2669 = vadd.f32 %v2488, %v2668
        %v2670 = vpop.f32.mrb[0].mxu0
        %v2671 = vpop.f32.mrb[0].mxu0
        %v2672 = vadd.f32 %v2488, %v2671
        %v2673 = vpop.f32.mrb[0].mxu0
        %2674 = vmatprep.mubr.bf16.mxu0 %v2450
        %2675 = vmatmul.mubr.bf16.gmra.mrb[0].mxu0 %v2449
        %v2676 = vpop.f32.mrb[0].mxu0
        %v2677 = vadd.f32 %v2488, %v2676
        %v2678 = vpop.f32.mrb[0].mxu0
        %v2679 = vpop.f32.mrb[0].mxu0
        %v2680 = vadd.f32 %v2488, %v2679
        %v2681 = vpop.f32.mrb[0].mxu0
        %2682 = vdwg.mxu0
        %v2683 = vmax.f32 %v2621, 0.0
        %v2684 = vmax.f32 %v2624, 0.0
        %v2685 = vmax.f32 %v2629, 0.0
        %v2686 = vmax.f32 %v2632, 0.0
        %v2687 = vmax.f32 %v2637, 0.0
        %v2688 = vmax.f32 %v2640, 0.0
        %v2689 = vmax.f32 %v2645, 0.0
        %v2690 = vmax.f32 %v2648, 0.0
        %v2691 = vmax.f32 %v2653, 0.0
        %v2692 = vmax.f32 %v2656, 0.0
        %v2693 = vmax.f32 %v2661, 0.0
        %v2694 = vmax.f32 %v2664, 0.0
        %v2695 = vmax.f32 %v2669, 0.0
        %v2696 = vmax.f32 %v2672, 0.0
        %v2697 = vmax.f32 %v2677, 0.0
        %v2698 = vmax.f32 %v2680, 0.0
        %v2699 = vpack.c.bf16 %v2684, %v2683
        %v2700 = vpack.c.bf16 %v2686, %v2685
        %v2701 = vpack.c.bf16 %v2688, %v2687
        %v2702 = vpack.c.bf16 %v2690, %v2689
        %v2703 = vpack.c.bf16 %v2692, %v2691
        %v2704 = vpack.c.bf16 %v2694, %v2693
        %v2705 = vpack.c.bf16 %v2696, %v2695
        %v2706 = vpack.c.bf16 %v2698, %v2697
        %v2707 = vld [vmem:[%s11] sm:$0xf]
        %v2708 = vld [vmem:[%s11 + $0x4] sm:$0xf]
        %v2709 = vld [vmem:[%s11 + $0x8] sm:$0xf]
        %v2710 = vld [vmem:[%s11 + $0xc] sm:$0xf]
        %v2711 = vld [vmem:[%s11 + $0x10] sm:$0xf]
        %v2712 = vld [vmem:[%s11 + $0x14] sm:$0xf]
        %v2713 = vld [vmem:[%s11 + $0x18] sm:$0xf]
        %v2714 = vld [vmem:[%s11 + $0x1c] sm:$0xf]
        %v2715 = vld [vmem:[%s11 + $0x20] sm:$0xf]
        %v2716 = vld [vmem:[%s11 + $0x24] sm:$0xf]
        %v2717 = vld [vmem:[%s11 + $0x28] sm:$0xf]
        %v2718 = vld [vmem:[%s11 + $0x2c] sm:$0xf]
        %v2719 = vld [vmem:[%s11 + $0x30] sm:$0xf]
        %v2720 = vld [vmem:[%s11 + $0x34] sm:$0xf]
        %v2721 = vld [vmem:[%s11 + $0x38] sm:$0xf]
        %v2722 = vld [vmem:[%s11 + $0x3c] sm:$0xf]
        %v2723 = vld [vmem:[%s12] sm:$0x1]
        %v2725 = vlaneseq
        %v2726 = vshrl.u32 %v2725, 7
        %v2727 = vsub.s32 0, %v2726
        %v2728 = vrot.slane %v2723, %v2727
        %v2746 = vunpack.c.l.b16 %v2707
        %v2747 = vunpack.c.l.b16 %v2708
        %v2748 = vunpack.c.l.b16 %v2709
        %v2749 = vunpack.c.l.b16 %v2710
        %v2750 = vunpack.c.l.b16 %v2711
        %v2751 = vunpack.c.l.b16 %v2712
        %v2752 = vunpack.c.l.b16 %v2713
        %v2753 = vunpack.c.l.b16 %v2714
        %v2754 = vunpack.c.l.b16 %v2715
        %v2755 = vunpack.c.l.b16 %v2716
        %v2756 = vunpack.c.l.b16 %v2717
        %v2757 = vunpack.c.l.b16 %v2718
        %v2758 = vunpack.c.l.b16 %v2719
        %v2759 = vunpack.c.l.b16 %v2720
        %v2760 = vunpack.c.l.b16 %v2721
        %v2761 = vunpack.c.l.b16 %v2722
        %v2762 = vpack.c.b16 %v2747, %v2746
        %v2763 = vpack.c.b16 %v2749, %v2748
        %v2764 = vpack.c.b16 %v2751, %v2750
        %v2765 = vpack.c.b16 %v2753, %v2752
        %v2766 = vpack.c.b16 %v2755, %v2754
        %v2767 = vpack.c.b16 %v2757, %v2756
        %v2768 = vpack.c.b16 %v2759, %v2758
        %v2769 = vpack.c.b16 %v2761, %v2760
        %2778 = vmatprep.subr.bf16.mxu0 0
        %2779 = vmatpush1.bf16.msra.mxu0 %v2762
        %2780 = vmatprep.subr.bf16.mxu0 0
        %2781 = vmatpush1.bf16.msra.mxu0 %v2763
        %2782 = vmatprep.subr.bf16.mxu0 0
        %2783 = vmatpush1.bf16.msra.mxu0 %v2764
        %2784 = vmatprep.subr.bf16.mxu0 0
        %2785 = vmatpush1.bf16.msra.mxu0 %v2765
        %2786 = vmatprep.subr.bf16.mxu0 0
        %2787 = vmatpush1.bf16.msra.mxu0 %v2766
        %2788 = vmatprep.subr.bf16.mxu0 0
        %2789 = vmatpush1.bf16.msra.mxu0 %v2767
        %2790 = vmatprep.subr.bf16.mxu0 0
        %2791 = vmatpush1.bf16.msra.mxu0 %v2768
        %2792 = vmatprep.subr.bf16.mxu0 0
        %2793 = vmatpush1.bf16.msra.mxu0 %v2769
        %2794 = vmatprep.subr.bf16.mxu0 0
        %2795 = vmatpush1.bf16.msra.mxu0 0
        %2796 = vmatprep.subr.bf16.mxu0 0
        %2797 = vmatpush1.bf16.msra.mxu0 0
        %2798 = vmatprep.subr.bf16.mxu0 0
        %2799 = vmatpush1.bf16.msra.mxu0 0
        %2800 = vmatprep.subr.bf16.mxu0 0
        %2801 = vmatpush1.bf16.msra.mxu0 0
        %2802 = vmatprep.subr.bf16.mxu0 0
        %2803 = vmatpush1.bf16.msra.mxu0 0
        %2804 = vmatprep.subr.bf16.mxu0 0
        %2805 = vmatpush1.bf16.msra.mxu0 0
        %2806 = vmatprep.subr.bf16.mxu0 0
        %2807 = vmatpush1.bf16.msra.mxu0 0
        %2808 = vmatprep.subr.bf16.mxu0 0
        %2809 = vmatpush1.bf16.msra.mxu0 0
        %2810 = vmatprep.mubr.bf16.mxu0 0
        %2811 = vmatmul.mubr.bf16.gmra.mrb[0].mxu0 %v2699
        %v2812 = vpop.f32.mrb[0].mxu0
        %v2813 = vadd.f32 %v2728, %v2812
        %v2814 = vpop.f32.mrb[0].mxu0
        %v2815 = vpop.f32.mrb[0].mxu0
        %v2816 = vadd.f32 %v2728, %v2815
        %v2817 = vpop.f32.mrb[0].mxu0
        %2818 = vmatprep.mubr.bf16.mxu0 0
        %2819 = vmatmul.mubr.bf16.gmra.mrb[0].mxu0 %v2700
        %v2820 = vpop.f32.mrb[0].mxu0
        %v2821 = vadd.f32 %v2728, %v2820
        %v2822 = vpop.f32.mrb[0].mxu0
        %v2823 = vpop.f32.mrb[0].mxu0
        %v2824 = vadd.f32 %v2728, %v2823
        %v2825 = vpop.f32.mrb[0].mxu0
        %2826 = vmatprep.mubr.bf16.mxu0 0
        %2827 = vmatmul.mubr.bf16.gmra.mrb[0].mxu0 %v2701
        %v2828 = vpop.f32.mrb[0].mxu0
        %v2829 = vadd.f32 %v2728, %v2828
        %v2830 = vpop.f32.mrb[0].mxu0
        %v2831 = vpop.f32.mrb[0].mxu0
        %v2832 = vadd.f32 %v2728, %v2831
        %v2833 = vpop.f32.mrb[0].mxu0
        %2834 = vmatprep.mubr.bf16.mxu0 0
        %2835 = vmatmul.mubr.bf16.gmra.mrb[0].mxu0 %v2702
        %v2836 = vpop.f32.mrb[0].mxu0
        %v2837 = vadd.f32 %v2728, %v2836
        %v2838 = vpop.f32.mrb[0].mxu0
        %v2839 = vpop.f32.mrb[0].mxu0
        %v2840 = vadd.f32 %v2728, %v2839
        %v2841 = vpop.f32.mrb[0].mxu0
        %2842 = vmatprep.mubr.bf16.mxu0 0
        %2843 = vmatmul.mubr.bf16.gmra.mrb[0].mxu0 %v2703
        %v2844 = vpop.f32.mrb[0].mxu0
        %v2845 = vadd.f32 %v2728, %v2844
        %v2846 = vpop.f32.mrb[0].mxu0
        %v2847 = vpop.f32.mrb[0].mxu0
        %v2848 = vadd.f32 %v2728, %v2847
        %v2849 = vpop.f32.mrb[0].mxu0
        %2850 = vmatprep.mubr.bf16.mxu0 0
        %2851 = vmatmul.mubr.bf16.gmra.mrb[0].mxu0 %v2704
        %v2852 = vpop.f32.mrb[0].mxu0
        %v2853 = vadd.f32 %v2728, %v2852
        %v2854 = vpop.f32.mrb[0].mxu0
        %v2855 = vpop.f32.mrb[0].mxu0
        %v2856 = vadd.f32 %v2728, %v2855
        %v2857 = vpop.f32.mrb[0].mxu0
        %2858 = vmatprep.mubr.bf16.mxu0 0
        %2859 = vmatmul.mubr.bf16.gmra.mrb[0].mxu0 %v2705
        %v2860 = vpop.f32.mrb[0].mxu0
        %v2861 = vadd.f32 %v2728, %v2860
        %v2862 = vpop.f32.mrb[0].mxu0
        %v2863 = vpop.f32.mrb[0].mxu0
        %v2864 = vadd.f32 %v2728, %v2863
        %v2865 = vpop.f32.mrb[0].mxu0
        %2866 = vmatprep.mubr.bf16.mxu0 0
        %2867 = vmatmul.mubr.bf16.gmra.mrb[0].mxu0 %v2706
        %v2868 = vpop.f32.mrb[0].mxu0
        %v2869 = vadd.f32 %v2728, %v2868
        %v2870 = vpop.f32.mrb[0].mxu0
        %v2871 = vpop.f32.mrb[0].mxu0
        %v2872 = vadd.f32 %v2728, %v2871
        %v2873 = vpop.f32.mrb[0].mxu0
        %2874 = vdwg.mxu0
        %2875 = vst [vmem:[%s516] sm:$0xff] %v2813
        %2876 = vst [vmem:[%s516 + $0x8] sm:$0xff] %v2816
        %2877 = vst [vmem:[%s516 + $0x10] sm:$0xff] %v2821
        %2878 = vst [vmem:[%s516 + $0x18] sm:$0xff] %v2824
        %2879 = vst [vmem:[%s516 + $0x20] sm:$0xff] %v2829
        %2880 = vst [vmem:[%s516 + $0x28] sm:$0xff] %v2832
        %2881 = vst [vmem:[%s516 + $0x30] sm:$0xff] %v2837
        %2882 = vst [vmem:[%s516 + $0x38] sm:$0xff] %v2840
        %2883 = vst [vmem:[%s516 + $0x40] sm:$0xff] %v2845
        %2884 = vst [vmem:[%s516 + $0x48] sm:$0xff] %v2848
        %2885 = vst [vmem:[%s516 + $0x50] sm:$0xff] %v2853
        %2886 = vst [vmem:[%s516 + $0x58] sm:$0xff] %v2856
        %2887 = vst [vmem:[%s516 + $0x60] sm:$0xff] %v2861
        %2888 = vst [vmem:[%s516 + $0x68] sm:$0xff] %v2864
        %2889 = vst [vmem:[%s516 + $0x70] sm:$0xff] %v2869
        %2890 = vst [vmem:[%s516 + $0x78] sm:$0xff] %v2872
        %s2891 = sand.u32 %s317, 1
        %s2892 = scalar_lea.sflag [#allocation4], %s2891
        %s2893 = sand.u32 %s317, 1
        %s2894 = smul.addr %s2893, 128
        %s2895 = scalar_lea.vmem [#allocation13], %s2894
        // Predicated region
        $region97: #{tpu_custom_call.1} parent=71 // pred_check
          %p2896 = pneg %p327
        $region98: #{tpu_custom_call.1} parent=71 // pred_check_branch
          %2898 = sbr.rel (%p2896) target = $region100
        $region99: #{tpu_custom_call.1} parent=71 // pred_region
          %s2899 = smul.u32 16, %s31
          %s2901 = ssub.s32 2048, 2048
          %2902 = vsyncadd %s2892, %s2901
          %s2903 = smul.addr %s2899, 128
          %s2904 = scalar_lea.hbm %s13, %s2903
          %s2905 = sshll.u32 %s2895, 4
          %s2906 = int_to_ptr.vmem [resolvable:$true] %s2905
          %2911 = dma.vmem_to_hbm [thread:$0]  %s2906, 2048, %s2904, %s2892, 128, 128, 8
        $region100: #{tpu_custom_call.1} parent=71 // pred_fallthru
          _
      $region72: #{tpu_custom_call.1} parent=5 // pred_fallthru
        _
      %p2912 = scmp.le.s32.totalorder 2, %s26
      // Predicated region
      $region101: #{tpu_custom_call.1} parent=5 // pred_check
        %p2913 = pneg %p2912
      $region102: #{tpu_custom_call.1} parent=5 // pred_check_branch
        %2915 = sbr.rel (%p2913) target = $region104
      $region103: #{tpu_custom_call.1} parent=5 // pred_region
        %s2916 = ssub.s32 %s26, 2
        // Predicated region
        $region105: #{tpu_custom_call.1} parent=103 // pred_check
          %p2917 = pneg %p333
        $region106: #{tpu_custom_call.1} parent=103 // pred_check_branch
          %2919 = sbr.rel (%p2917) target = $region108
        $region107: #{tpu_custom_call.1} parent=103 // pred_region
          %s2920 = sand.u32 %s318, 1
          %s2921 = scalar_lea.sflag [#allocation4], %s2920
          %s2922 = sand.u32 %s318, 1
          %s2923 = smul.addr %s2922, 128
          %s2924 = scalar_lea.vmem [#allocation13], %s2923
          %2925 = dma.done %s2921, 2048
        $region108: #{tpu_custom_call.1} parent=103 // pred_fallthru
          _
      $region104: #{tpu_custom_call.1} parent=5 // pred_fallthru
        _
    $region6: #{tpu_custom_call.1} parent=1 // loop_footer
      %s30 = sadd.s32 1, %s26
    $region7: #{tpu_custom_call.1} parent=1 // loop_footer_branch
      %25 = sbr.rel target = $region3
    $region8: #{tpu_custom_call.1} parent=1 // loop_exit
      _
    %2926 = vsyncpa [#allocation3], 1
    %s2927 = scalar_lea.sflag [#allocation3], 1
    %2928 = vsyncpa %s2927, 1
    %2929 = vsyncpa [#allocation6], 1
    %2930 = vsyncpa [#allocation9], 1
    %2931 = vsyncpa [#allocation12], 1
    %2932 = vsyncpa [#allocation4], 1
    %s2933 = scalar_lea.sflag [#allocation4], 1
    %2934 = vsyncpa %s2933, 1

</llo_original>
